<compile_context>
chip_gen: v7x
topology: tpu7x:2x2x1
jax: 0.10.0
libtpu: 0.0.40
codegen_flags: <defaults>
</compile_context>

<pallas_src>
import numpy as np
import jax
import jax.numpy as jnp
from jax import lax
from jax.experimental import pallas as pl
from jax.experimental.pallas import tpu as pltpu

C_FEAT = 256      # Linear(256, 128) -> feature channel count
N_CLS = 10        # label_lst[:, :10] / classifier out dim
HIDDEN = 128
LOGIT_PAD = 128   # classifier columns padded 10 -> 128 for lane-dense stores
N_REPEAT = 10     # "for _ in range(10)" outer loop
RNC = N_REPEAT * N_CLS
BLOCK_SIZE = 3
DROP_PROB = 0.3
MAX_HW_CHUNK = 2048   # HW tile per grid step (double-buffered feat ~2 MB at bf16)

# Constant row-expansion selectors: row i of the fused (RNC, HW) mask corresponds to
# repeat r = i // 10 and class c = i % 10.  (100x10 bf16 each, ~2 KB.)
_rows = np.arange(RNC)
REP_SEL = jnp.asarray((_rows[:, None] // N_CLS) == np.arange(N_REPEAT)[None, :],
                      dtype=jnp.bfloat16)
CLS_SEL = jnp.asarray((_rows[:, None] % N_CLS) == np.arange(N_CLS)[None, :],
                      dtype=jnp.bfloat16)


# ---------------- DropBlock2D block-mask (plain-JAX glue, deterministic PRNG) ------
def dropblock_mask(key, B, H, W, block_size=BLOCK_SIZE, drop_prob=DROP_PROB):
    """Training-mode DropBlock2D block mask, shared across channels: (B, H, W) in {0,1}.

    The package's numel/kept rescale is deliberately NOT applied: it cancels exactly in
    pooled/cnt inside the kernel, and dropping it keeps the masks exact 0/1 (bf16-exact).
    """
    gamma = drop_prob / (block_size ** 2)
    seed = (jax.random.uniform(key, (B, H, W)) < gamma).astype(jnp.float32)
    pad = block_size // 2
    blocked = lax.reduce_window(
        seed, 0.0, lax.max,
        window_dimensions=(1, block_size, block_size),
        window_strides=(1, 1, 1),
        padding=((0, 0), (pad, pad), (pad, pad)))
    return 1.0 - blocked


# ------------- fused kernel: mask build -> pool -> mean -> MLP -> classifier -> L2 --
def _fused_kernel(rep_sel_ref, cls_sel_ref, label_ref, block_ref, feat_ref,
                  w1_ref, b1_ref, w2_ref, b2_ref, wc_ref,
                  fnorm_ref, logit_ref, acc_ref, cnt_ref):
    k = pl.program_id(1)

    @pl.when(k == 0)
    def _init():
        acc_ref[...] = jnp.zeros_like(acc_ref)
        cnt_ref[...] = jnp.zeros_like(cnt_ref)

    # Build the (RNC, HWc) 0/1 mask in VMEM (never written to HBM).
    block_exp = jnp.dot(rep_sel_ref[...], block_ref[...],
                        preferred_element_type=jnp.float32)     # row i <- repeat i//10
    label_exp = jnp.dot(cls_sel_ref[...], label_ref[...],
                        preferred_element_type=jnp.float32)     # row i <- class  i%10
    mask_f32 = block_exp * label_exp                            # exact {0, 1}
    mask_bf = mask_f32.astype(jnp.bfloat16)

    # Masked spatial pooling on the MXU, f32 accumulate across HW chunks.
    acc_ref[...] += lax.dot_general(
        mask_bf, feat_ref[...],
        dimension_numbers=(((1,), (1,)), ((), ())),
        preferred_element_type=jnp.float32)                     # (RNC, C_FEAT)
    cnt_ref[...] += jnp.sum(mask_f32, axis=-1, keepdims=True)   # (RNC, 1), exact ints

    @pl.when(k == pl.num_programs(1) - 1)
    def _finalize():
        pooled = acc_ref[...]
        cnt = cnt_ref[...]
        # Masked EUP reciprocal (keep the select: 1/0 -> inf must not leak).
        inv = jnp.where(cnt > 0, pl.reciprocal(cnt, approx=True), 0.0)
        mean = (pooled * inv).astype(jnp.bfloat16)              # (RNC, 256)

        # MLP head in bf16 (f32 accumulate): Linear(256,128) -> ReLU -> Linear(128,128)
        h = jnp.dot(mean, w1_ref[...],
                    preferred_element_type=jnp.float32) + b1_ref[...]
        h = jnp.maximum(h, 0.0).astype(jnp.bfloat16)
        feat = jnp.dot(h, w2_ref[...],
                       preferred_element_type=jnp.float32) + b2_ref[...]

        # Classifier (wc cols 10..127 are zero padding); stash cnt in column N_CLS so
        # the wrapper never re-reduces the masks.
        logits = jnp.dot(feat.astype(jnp.bfloat16), wc_ref[...],
                         preferred_element_type=jnp.float32)
        col = lax.broadcasted_iota(jnp.int32, logits.shape, 1)
        logit_ref[...] = jnp.where(col == N_CLS, cnt, logits)

        # F.normalize(p=2, dim=1, eps=1e-12) via EUP rsqrt (eps^2 under the rsqrt).
        sumsq = jnp.sum(feat * feat, axis=-1, keepdims=True)
        fnorm_ref[...] = feat * lax.rsqrt(jnp.maximum(sumsq, 1e-24))


def _pick_hw_chunk(hw):
    if hw <= MAX_HW_CHUNK:
        return hw
    for c in range(MAX_HW_CHUNK, 127, -128):
        if hw % c == 0:
            return c
    return hw   # fallback: single whole-HW block


def fused_metric_head(label_bf, block_bf, feat_bf, params):
    # label_bf: (B, 10, HW), block_bf: (B, 10, HW), feat_bf: (B, 256, HW) -- all bf16.
    B, _, HW = label_bf.shape
    chunk = _pick_hw_chunk(HW)
    kc = HW // chunk
    return pl.pallas_call(
        _fused_kernel,
        out_shape=(jax.ShapeDtypeStruct((B, RNC, HIDDEN), jnp.float32),
                   jax.ShapeDtypeStruct((B, RNC, LOGIT_PAD), jnp.float32)),
        grid=(B, kc),
        in_specs=[
            pl.BlockSpec((RNC, N_REPEAT), lambda b, k: (0, 0)),          # repeat selector
            pl.BlockSpec((RNC, N_CLS), lambda b, k: (0, 0)),             # class selector
            pl.BlockSpec((None, N_CLS, chunk), lambda b, k: (b, 0, k)),  # label10
            pl.BlockSpec((None, N_REPEAT, chunk), lambda b, k: (b, 0, k)),  # DropBlock masks
            pl.BlockSpec((None, C_FEAT, chunk), lambda b, k: (b, 0, k)),    # feature
            pl.BlockSpec((C_FEAT, HIDDEN), lambda b, k: (0, 0)),         # w1 (bf16)
            pl.BlockSpec((1, HIDDEN), lambda b, k: (0, 0)),              # b1 (f32)
            pl.BlockSpec((HIDDEN, HIDDEN), lambda b, k: (0, 0)),         # w2 (bf16)
            pl.BlockSpec((1, HIDDEN), lambda b, k: (0, 0)),              # b2 (f32)
            pl.BlockSpec((HIDDEN, LOGIT_PAD), lambda b, k: (0, 0)),      # wc_pad (bf16)
        ],
        out_specs=(
            pl.BlockSpec((None, RNC, HIDDEN), lambda b, k: (b, 0, 0)),
            pl.BlockSpec((None, RNC, LOGIT_PAD), lambda b, k: (b, 0, 0)),
        ),
        scratch_shapes=[pltpu.VMEM((RNC, C_FEAT), jnp.float32),   # pooled accumulator
                        pltpu.VMEM((RNC, 1), jnp.float32)],       # mask-count accumulator
        compiler_params=pltpu.CompilerParams(
            dimension_semantics=("parallel", "arbitrary"),
            vmem_limit_bytes=32 * 1024 * 1024),
    )(REP_SEL, CLS_SEL, label_bf, block_bf, feat_bf,
      params["w1"], params["b1"], params["w2"], params["b2"], params["wc_pad"])


# ---------------- full forward (glue in plain JAX) ---------------------------------
def metric_model_forward(params, feature, label_lst, key):
    B, C, H, W = feature.shape
    assert C == C_FEAT
    HW = H * W
    label10 = label_lst[:, :N_CLS].reshape(B, N_CLS, HW)

    # 10 independent DropBlock spatial masks (one per repeat, shared across channels).
    keys = jax.random.split(key, N_REPEAT)
    block_masks = jax.vmap(lambda k: dropblock_mask(k, B, H, W), out_axes=1)(keys)
    block_bf = block_masks.reshape(B, N_REPEAT, HW).astype(jnp.bfloat16)   # exact 0/1
    label_bf = label10.astype(jnp.bfloat16)                                # exact 0/1
    feat_bf = feature.reshape(B, C, HW).astype(jnp.bfloat16)   # ~3 mantissa bits traded

    fnorm_k, logit_k = fused_metric_head(label_bf, block_bf, feat_bf, params)

    # Reorder kernel rows (b, r, c) into PyTorch concat order (r, c, b).
    fnorm = fnorm_k.reshape(B, N_REPEAT, N_CLS, HIDDEN) \
                   .transpose(1, 2, 0, 3).reshape(-1, HIDDEN)
    logit_full = logit_k.reshape(B, N_REPEAT, N_CLS, LOGIT_PAD) \
                        .transpose(1, 2, 0, 3).reshape(-1, LOGIT_PAD)
    logit = logit_full[:, :N_CLS]
    # TODO(synk): PyTorch drops rows whose mask count is zero (data-dependent shape);
    # all rows are kept here and `valid` marks the rows PyTorch would keep.
    valid = logit_full[:, N_CLS] != 0.0
    labels = jnp.broadcast_to(
        jnp.arange(N_CLS, dtype=jnp.int32)[None, :, None],
        (N_REPEAT, N_CLS, B)).reshape(-1)

    return fnorm, labels, logit, valid


def init_params(key):
    k1, k2, k3, k4, k5 = jax.random.split(key, 5)

    def lin(k, fan_in, fan_out):
        bound = 1.0 / (fan_in ** 0.5)
        return jax.random.uniform(k, (fan_in, fan_out), jnp.float32, -bound, bound)

    wc = lin(k5, HIDDEN, N_CLS)   # classifier has no bias
    wc_pad = jnp.zeros((HIDDEN, LOGIT_PAD), jnp.float32).at[:, :N_CLS].set(wc)
    return {
        "w1": lin(k1, C_FEAT, HIDDEN).astype(jnp.bfloat16),
        "b1": jax.random.uniform(k2, (1, HIDDEN), jnp.float32, -1.0 / 16.0, 1.0 / 16.0),
        "w2": lin(k3, HIDDEN, HIDDEN).astype(jnp.bfloat16),
        "b2": jax.random.uniform(k4, (1, HIDDEN), jnp.float32,
                                 -1.0 / (HIDDEN ** 0.5), 1.0 / (HIDDEN ** 0.5)),
        "wc_pad": wc_pad.astype(jnp.bfloat16),
    }


if __name__ == "__main__":
    key = jax.random.PRNGKey(0)
    kp, kf, kl, kd = jax.random.split(key, 4)

    B, H, W = 2, 16, 16
    params = init_params(kp)
    feature = jax.random.normal(kf, (B, C_FEAT, H, W), jnp.float32)
    # label_lst: one-hot segmentation-style masks over 12 classes (sliced to 10 inside).
    cls_map = jax.random.randint(kl, (B, H, W), 0, 12)
    label_lst = jax.nn.one_hot(cls_map, 12, dtype=jnp.float32).transpose(0, 3, 1, 2)

    fwd = jax.jit(metric_model_forward)
    fnorm, labels, logit, valid = fwd(params, feature, label_lst, kd)
    jax.block_until_ready((fnorm, labels, logit, valid))

    N = N_REPEAT * N_CLS * B
    assert fnorm.shape == (N, HIDDEN)
    assert labels.shape == (N,)
    assert logit.shape == (N, N_CLS)
    assert valid.shape == (N,)
    assert bool(jnp.all(jnp.isfinite(fnorm))) and bool(jnp.all(jnp.isfinite(logit)))
    print("KERNEL_OK")
</pallas_src>

<mosaic_0001>
module attributes {stable_mosaic.version = 11 : i64} {
  func.func @_fused_kernel(%arg0: i32, %arg1: i32, %arg2: memref<100x10xbf16, #tpu.memory_space<vmem>>, %arg3: memref<100x10xbf16, #tpu.memory_space<vmem>>, %arg4: memref<1x10x256xbf16, #tpu.memory_space<vmem>>, %arg5: memref<1x10x256xbf16, #tpu.memory_space<vmem>>, %arg6: memref<1x256x256xbf16, #tpu.memory_space<vmem>>, %arg7: memref<256x128xbf16, #tpu.memory_space<vmem>>, %arg8: memref<1x128xf32, #tpu.memory_space<vmem>>, %arg9: memref<128x128xbf16, #tpu.memory_space<vmem>>, %arg10: memref<1x128xf32, #tpu.memory_space<vmem>>, %arg11: memref<128x128xbf16, #tpu.memory_space<vmem>>, %arg12: memref<1x100x128xf32, #tpu.memory_space<vmem>>, %arg13: memref<1x100x128xf32, #tpu.memory_space<vmem>>, %arg14: memref<100x256xf32, #tpu.memory_space<vmem>>, %arg15: memref<100x1xf32, #tpu.memory_space<vmem>>) attributes {dimension_semantics = [#tpu.dimension_semantics<parallel>, #tpu.dimension_semantics<arbitrary>], iteration_bounds = array<i64: 2, 1>, scalar_prefetch = 0 : i64, scratch_operands = 2 : i64, tpu.core_type = #tpu.core_type<tc>, window_params = [{pipeline_mode = #tpu.pipeline_mode<synchronous>, transform_indices = @transform_0, window_bounds = array<i64: 100, 10>}, {pipeline_mode = #tpu.pipeline_mode<synchronous>, transform_indices = @transform_1, window_bounds = array<i64: 100, 10>}, {transform_indices = @transform_2, window_bounds = array<i64: 1, 10, 256>}, {transform_indices = @transform_3, window_bounds = array<i64: 1, 10, 256>}, {transform_indices = @transform_4, window_bounds = array<i64: 1, 256, 256>}, {pipeline_mode = #tpu.pipeline_mode<synchronous>, transform_indices = @transform_5, window_bounds = array<i64: 256, 128>}, {pipeline_mode = #tpu.pipeline_mode<synchronous>, transform_indices = @transform_6, window_bounds = array<i64: 1, 128>}, {pipeline_mode = #tpu.pipeline_mode<synchronous>, transform_indices = @transform_7, window_bounds = array<i64: 128, 128>}, {pipeline_mode = #tpu.pipeline_mode<synchronous>, transform_indices = @transform_8, window_bounds = array<i64: 1, 128>}, {pipeline_mode = #tpu.pipeline_mode<synchronous>, transform_indices = @transform_9, window_bounds = array<i64: 128, 128>}, {transform_indices = @transform_10, window_bounds = array<i64: 1, 100, 128>}, {transform_indices = @transform_11, window_bounds = array<i64: 1, 100, 128>}]} {
    %c0_i32 = arith.constant 0 : i32
    %0 = arith.cmpi eq, %arg1, %c0_i32 : i32
    %1 = arith.extui %0 : i1 to i32
    %c0_i32_0 = arith.constant 0 : i32
    %2 = arith.cmpi ne, %1, %c0_i32_0 : i32
    scf.if %2 {
      %cst_26 = arith.constant 0.000000e+00 : f32
      %27 = vector.broadcast %cst_26 : f32 to vector<100x256xf32>
      %c0_27 = arith.constant 0 : index
      %c0_28 = arith.constant 0 : index
      %28 = vector.load %arg14[%c0_27, %c0_28] : memref<100x256xf32, #tpu.memory_space<vmem>>, vector<100x256xf32>
      tpu.vector_store %arg14[%c0_27, %c0_28], %27 {strides = array<i32>} : memref<100x256xf32, #tpu.memory_space<vmem>>, vector<100x256xf32>,
      %cst_29 = arith.constant 0.000000e+00 : f32
      %29 = vector.broadcast %cst_29 : f32 to vector<100x1xf32>
      %c0_30 = arith.constant 0 : index
      %c0_31 = arith.constant 0 : index
      %30 = vector.load %arg15[%c0_30, %c0_31] : memref<100x1xf32, #tpu.memory_space<vmem>>, vector<100x1xf32>
      tpu.vector_store %arg15[%c0_30, %c0_31], %29 {strides = array<i32>} : memref<100x1xf32, #tpu.memory_space<vmem>>, vector<100x1xf32>,
    } else {
    }
    %c0 = arith.constant 0 : index
    %c0_1 = arith.constant 0 : index
    %3 = vector.load %arg2[%c0, %c0_1] : memref<100x10xbf16, #tpu.memory_space<vmem>>, vector<100x10xbf16>
    %c0_2 = arith.constant 0 : index
    %c0_3 = arith.constant 0 : index
    %c0_4 = arith.constant 0 : index
    %4 = vector.load %arg5[%c0_2, %c0_3, %c0_4] : memref<1x10x256xbf16, #tpu.memory_space<vmem>>, vector<1x10x256xbf16>
    %5 = vector.shape_cast %4 : vector<1x10x256xbf16> to vector<10x256xbf16>
    %cst = arith.constant dense<0.000000e+00> : vector<100x256xf32>
    %6 = tpu.matmul %3, %5, %cst {dimension_numbers = #tpu.dot_dimension_numbers<[1], [0], [0], [1], [0, 0, 1, 1], [], []>} : vector<100x10xbf16>, vector<10x256xbf16>, vector<100x256xf32> -> vector<100x256xf32>
    %c0_5 = arith.constant 0 : index
    %c0_6 = arith.constant 0 : index
    %7 = vector.load %arg3[%c0_5, %c0_6] : memref<100x10xbf16, #tpu.memory_space<vmem>>, vector<100x10xbf16>
    %c0_7 = arith.constant 0 : index
    %c0_8 = arith.constant 0 : index
    %c0_9 = arith.constant 0 : index
    %8 = vector.load %arg4[%c0_7, %c0_8, %c0_9] : memref<1x10x256xbf16, #tpu.memory_space<vmem>>, vector<1x10x256xbf16>
    %9 = vector.shape_cast %8 : vector<1x10x256xbf16> to vector<10x256xbf16>
    %cst_10 = arith.constant dense<0.000000e+00> : vector<100x256xf32>
    %10 = tpu.matmul %7, %9, %cst_10 {dimension_numbers = #tpu.dot_dimension_numbers<[1], [0], [0], [1], [0, 0, 1, 1], [], []>} : vector<100x10xbf16>, vector<10x256xbf16>, vector<100x256xf32> -> vector<100x256xf32>
    %11 = arith.mulf %6, %10 : vector<100x256xf32>
    %12 = arith.truncf %11 : vector<100x256xf32> to vector<100x256xbf16>
    %c0_11 = arith.constant 0 : index
    %c0_12 = arith.constant 0 : index
    %13 = vector.load %arg14[%c0_11, %c0_12] : memref<100x256xf32, #tpu.memory_space<vmem>>, vector<100x256xf32>
    %c0_13 = arith.constant 0 : index
    %c0_14 = arith.constant 0 : index
    %c0_15 = arith.constant 0 : index
    %14 = vector.load %arg6[%c0_13, %c0_14, %c0_15] : memref<1x256x256xbf16, #tpu.memory_space<vmem>>, vector<1x256x256xbf16>
    %15 = vector.shape_cast %14 : vector<1x256x256xbf16> to vector<256x256xbf16>
    %cst_16 = arith.constant dense<0.000000e+00> : vector<100x256xf32>
    %16 = tpu.matmul %12, %15, %cst_16 {dimension_numbers = #tpu.dot_dimension_numbers<[1], [1], [0], [0], [0, 0, 1, 0], [], []>} : vector<100x256xbf16>, vector<256x256xbf16>, vector<100x256xf32> -> vector<100x256xf32>
    %17 = arith.addf %13, %16 : vector<100x256xf32>
    %c0_17 = arith.constant 0 : index
    %c0_18 = arith.constant 0 : index
    %18 = vector.load %arg14[%c0_17, %c0_18] : memref<100x256xf32, #tpu.memory_space<vmem>>, vector<100x256xf32>
    tpu.vector_store %arg14[%c0_17, %c0_18], %17 {strides = array<i32>} : memref<100x256xf32, #tpu.memory_space<vmem>>, vector<100x256xf32>,
    %c0_19 = arith.constant 0 : index
    %c0_20 = arith.constant 0 : index
    %19 = vector.load %arg15[%c0_19, %c0_20] : memref<100x1xf32, #tpu.memory_space<vmem>>, vector<100x1xf32>
    %cst_21 = arith.constant dense<0.000000e+00> : vector<100xf32>
    %20 = vector.multi_reduction <add>, %11, %cst_21 [1] : vector<100x256xf32> to vector<100xf32>
    %21 = vector.shape_cast %20 : vector<100xf32> to vector<100x1xf32>
    %22 = arith.addf %19, %21 : vector<100x1xf32>
    %c0_22 = arith.constant 0 : index
    %c0_23 = arith.constant 0 : index
    %23 = vector.load %arg15[%c0_22, %c0_23] : memref<100x1xf32, #tpu.memory_space<vmem>>, vector<100x1xf32>
    tpu.vector_store %arg15[%c0_22, %c0_23], %22 {strides = array<i32>} : memref<100x1xf32, #tpu.memory_space<vmem>>, vector<100x1xf32>,
    %c0_i32_24 = arith.constant 0 : i32
    %24 = arith.cmpi eq, %arg1, %c0_i32_24 : i32
    %25 = arith.extui %24 : i1 to i32
    %c0_i32_25 = arith.constant 0 : i32
    %26 = arith.cmpi ne, %25, %c0_i32_25 : i32
    scf.if %26 {
      %c0_26 = arith.constant 0 : index
      %c0_27 = arith.constant 0 : index
      %27 = vector.load %arg14[%c0_26, %c0_27] : memref<100x256xf32, #tpu.memory_space<vmem>>, vector<100x256xf32>
      %c0_28 = arith.constant 0 : index
      %c0_29 = arith.constant 0 : index
      %28 = vector.load %arg15[%c0_28, %c0_29] : memref<100x1xf32, #tpu.memory_space<vmem>>, vector<100x1xf32>
      %cst_30 = arith.constant 0.000000e+00 : f32
      %29 = vector.broadcast %cst_30 : f32 to vector<100x1xf32>
      %30 = arith.cmpf ogt, %28, %29 : vector<100x1xf32>
      %31 = tpu.reciprocal %28 {approx = true} : vector<100x1xf32> -> vector<100x1xf32>
      %cst_31 = arith.constant 0.000000e+00 : f32
      %32 = vector.broadcast %cst_31 : f32 to vector<100x1xf32>
      %33 = arith.select %30, %31, %32 : vector<100x1xi1>, vector<100x1xf32>
      %34 = vector.broadcast %33 : vector<100x1xf32> to vector<100x256xf32>
      %35 = arith.mulf %27, %34 : vector<100x256xf32>
      %36 = arith.truncf %35 : vector<100x256xf32> to vector<100x256xbf16>
      %c0_32 = arith.constant 0 : index
      %c0_33 = arith.constant 0 : index
      %37 = vector.load %arg7[%c0_32, %c0_33] : memref<256x128xbf16, #tpu.memory_space<vmem>>, vector<256x128xbf16>
      %cst_34 = arith.constant dense<0.000000e+00> : vector<100x128xf32>
      %38 = tpu.matmul %36, %37, %cst_34 {dimension_numbers = #tpu.dot_dimension_numbers<[1], [0], [0], [1], [0, 0, 1, 1], [], []>} : vector<100x256xbf16>, vector<256x128xbf16>, vector<100x128xf32> -> vector<100x128xf32>
      %c0_35 = arith.constant 0 : index
      %c0_36 = arith.constant 0 : index
      %39 = vector.load %arg8[%c0_35, %c0_36] : memref<1x128xf32, #tpu.memory_space<vmem>>, vector<1x128xf32>
      %40 = vector.broadcast %39 : vector<1x128xf32> to vector<100x128xf32>
      %41 = arith.addf %38, %40 : vector<100x128xf32>
      %cst_37 = arith.constant 0.000000e+00 : f32
      %42 = vector.broadcast %cst_37 : f32 to vector<100x128xf32>
      %43 = arith.maximumf %41, %42 : vector<100x128xf32>
      %44 = arith.truncf %43 : vector<100x128xf32> to vector<100x128xbf16>
      %c0_38 = arith.constant 0 : index
      %c0_39 = arith.constant 0 : index
      %45 = vector.load %arg9[%c0_38, %c0_39] : memref<128x128xbf16, #tpu.memory_space<vmem>>, vector<128x128xbf16>
      %cst_40 = arith.constant dense<0.000000e+00> : vector<100x128xf32>
      %46 = tpu.matmul %44, %45, %cst_40 {dimension_numbers = #tpu.dot_dimension_numbers<[1], [0], [0], [1], [0, 0, 1, 1], [], []>} : vector<100x128xbf16>, vector<128x128xbf16>, vector<100x128xf32> -> vector<100x128xf32>
      %c0_41 = arith.constant 0 : index
      %c0_42 = arith.constant 0 : index
      %47 = vector.load %arg10[%c0_41, %c0_42] : memref<1x128xf32, #tpu.memory_space<vmem>>, vector<1x128xf32>
      %48 = vector.broadcast %47 : vector<1x128xf32> to vector<100x128xf32>
      %49 = arith.addf %46, %48 : vector<100x128xf32>
      %50 = arith.truncf %49 : vector<100x128xf32> to vector<100x128xbf16>
      %c0_43 = arith.constant 0 : index
      %c0_44 = arith.constant 0 : index
      %51 = vector.load %arg11[%c0_43, %c0_44] : memref<128x128xbf16, #tpu.memory_space<vmem>>, vector<128x128xbf16>
      %cst_45 = arith.constant dense<0.000000e+00> : vector<100x128xf32>
      %52 = tpu.matmul %50, %51, %cst_45 {dimension_numbers = #tpu.dot_dimension_numbers<[1], [0], [0], [1], [0, 0, 1, 1], [], []>} : vector<100x128xbf16>, vector<128x128xbf16>, vector<100x128xf32> -> vector<100x128xf32>
      %53 = tpu.iota {dimensions = array<i32: 1>} : vector<100x128xi32>
      %c10_i32 = arith.constant 10 : i32
      %54 = vector.broadcast %c10_i32 : i32 to vector<100x128xi32>
      %55 = arith.cmpi eq, %53, %54 : vector<100x128xi32>
      %56 = vector.shape_cast %28 : vector<100x1xf32> to vector<100x1xf32>
      %57 = vector.broadcast %56 : vector<100x1xf32> to vector<100x128xf32>
      %58 = arith.select %55, %57, %52 : vector<100x128xi1>, vector<100x128xf32>
      %c0_46 = arith.constant 0 : index
      %c0_47 = arith.constant 0 : index
      %c0_48 = arith.constant 0 : index
      %59 = vector.load %arg13[%c0_46, %c0_47, %c0_48] : memref<1x100x128xf32, #tpu.memory_space<vmem>>, vector<1x100x128xf32>
      %60 = vector.shape_cast %59 : vector<1x100x128xf32> to vector<100x128xf32>
      %61 = vector.shape_cast %58 : vector<100x128xf32> to vector<1x100x128xf32>
      tpu.vector_store %arg13[%c0_46, %c0_47, %c0_48], %61 {strides = array<i32>} : memref<1x100x128xf32, #tpu.memory_space<vmem>>, vector<1x100x128xf32>,
      %62 = arith.mulf %49, %49 : vector<100x128xf32>
      %cst_49 = arith.constant dense<0.000000e+00> : vector<100xf32>
      %63 = vector.multi_reduction <add>, %62, %cst_49 [1] : vector<100x128xf32> to vector<100xf32>
      %64 = vector.shape_cast %63 : vector<100xf32> to vector<100x1xf32>
      %cst_50 = arith.constant 1.000000e-24 : f32
      %65 = vector.broadcast %cst_50 : f32 to vector<100x1xf32>
      %66 = arith.maximumf %64, %65 : vector<100x1xf32>
      %67 = math.rsqrt %66 : vector<100x1xf32>
      %68 = vector.broadcast %67 : vector<100x1xf32> to vector<100x128xf32>
      %69 = arith.mulf %49, %68 : vector<100x128xf32>
      %c0_51 = arith.constant 0 : index
      %c0_52 = arith.constant 0 : index
      %c0_53 = arith.constant 0 : index
      %70 = vector.load %arg12[%c0_51, %c0_52, %c0_53] : memref<1x100x128xf32, #tpu.memory_space<vmem>>, vector<1x100x128xf32>
      %71 = vector.shape_cast %70 : vector<1x100x128xf32> to vector<100x128xf32>
      %72 = vector.shape_cast %69 : vector<100x128xf32> to vector<1x100x128xf32>
      tpu.vector_store %arg12[%c0_51, %c0_52, %c0_53], %72 {strides = array<i32>} : memref<1x100x128xf32, #tpu.memory_space<vmem>>, vector<1x100x128xf32>,
    } else {
    }
    return
  }
  func.func @transform_0(%arg0: i32, %arg1: i32) -> (i32, i32) {
    %c0_i32 = arith.constant 0 : i32
    %c0_i32_0 = arith.constant 0 : i32
    %c0_i32_1 = arith.constant 0 : i32
    return %c0_i32, %c0_i32_0 : i32, i32
  }
  func.func @transform_1(%arg0: i32, %arg1: i32) -> (i32, i32) {
    %c0_i32 = arith.constant 0 : i32
    %c0_i32_0 = arith.constant 0 : i32
    %c0_i32_1 = arith.constant 0 : i32
    return %c0_i32, %c0_i32_0 : i32, i32
  }
  func.func @transform_2(%arg0: i32, %arg1: i32) -> (i32, i32, i32) {
    %c0_i32 = arith.constant 0 : i32
    %c0_i32_0 = arith.constant 0 : i32
    return %arg0, %c0_i32, %arg1 : i32, i32, i32
  }
  func.func @transform_3(%arg0: i32, %arg1: i32) -> (i32, i32, i32) {
    %c0_i32 = arith.constant 0 : i32
    %c0_i32_0 = arith.constant 0 : i32
    return %arg0, %c0_i32, %arg1 : i32, i32, i32
  }
  func.func @transform_4(%arg0: i32, %arg1: i32) -> (i32, i32, i32) {
    %c0_i32 = arith.constant 0 : i32
    %c0_i32_0 = arith.constant 0 : i32
    return %arg0, %c0_i32, %arg1 : i32, i32, i32
  }
  func.func @transform_5(%arg0: i32, %arg1: i32) -> (i32, i32) {
    %c0_i32 = arith.constant 0 : i32
    %c0_i32_0 = arith.constant 0 : i32
    %c0_i32_1 = arith.constant 0 : i32
    return %c0_i32, %c0_i32_0 : i32, i32
  }
  func.func @transform_6(%arg0: i32, %arg1: i32) -> (i32, i32) {
    %c0_i32 = arith.constant 0 : i32
    %c0_i32_0 = arith.constant 0 : i32
    %c0_i32_1 = arith.constant 0 : i32
    return %c0_i32, %c0_i32_0 : i32, i32
  }
  func.func @transform_7(%arg0: i32, %arg1: i32) -> (i32, i32) {
    %c0_i32 = arith.constant 0 : i32
    %c0_i32_0 = arith.constant 0 : i32
    %c0_i32_1 = arith.constant 0 : i32
    return %c0_i32, %c0_i32_0 : i32, i32
  }
  func.func @transform_8(%arg0: i32, %arg1: i32) -> (i32, i32) {
    %c0_i32 = arith.constant 0 : i32
    %c0_i32_0 = arith.constant 0 : i32
    %c0_i32_1 = arith.constant 0 : i32
    return %c0_i32, %c0_i32_0 : i32, i32
  }
  func.func @transform_9(%arg0: i32, %arg1: i32) -> (i32, i32) {
    %c0_i32 = arith.constant 0 : i32
    %c0_i32_0 = arith.constant 0 : i32
    %c0_i32_1 = arith.constant 0 : i32
    return %c0_i32, %c0_i32_0 : i32, i32
  }
  func.func @transform_10(%arg0: i32, %arg1: i32) -> (i32, i32, i32) {
    %c0_i32 = arith.constant 0 : i32
    %c0_i32_0 = arith.constant 0 : i32
    %c0_i32_1 = arith.constant 0 : i32
    return %arg0, %c0_i32, %c0_i32_0 : i32, i32, i32
  }
  func.func @transform_11(%arg0: i32, %arg1: i32) -> (i32, i32, i32) {
    %c0_i32 = arith.constant 0 : i32
    %c0_i32_0 = arith.constant 0 : i32
    %c0_i32_1 = arith.constant 0 : i32
    return %arg0, %c0_i32, %c0_i32_0 : i32, i32, i32
  }
}

</mosaic_0001>

<llo_original>
// kernel: metric_model_forward.3
$region0: #{metric_model_forward.3}
  #allocation0 [shape = 'u32[]', space=smem, size = 0x4, offset = 0x4, fixed_abs, tag = 'smem constant byte address 0x4 - core index']
  #allocation1 [shape = 'u32[144,128]{1,0:T(1,128)}', space=vmem, size = 0x12000, scoped, tag = 'internal scratch']
  #allocation2 [shape = 'f32[100,256]{1,0:T(8,128)}', space=vmem, size = 0x1a000, scoped, tag = 'scratch operand']
  #allocation3 [shape = 'f32[100,1]{1,0:T(8,128)}', space=vmem, size = 0xd000, scoped, tag = 'scratch operand']
  %s0 = inlined_call_operand.vmem [shape: bf16[100,10], index: 0, kind: input, shape index: {}]
  %s1 = inlined_call_operand.vmem [shape: bf16[100,10], index: 1, kind: input, shape index: {}]
  %s2 = inlined_call_operand.vmem [shape: bf16[2,10,256], index: 2, kind: input, shape index: {}]
  %s3 = inlined_call_operand.vmem [shape: bf16[2,10,256], index: 3, kind: input, shape index: {}]
  %s4 = inlined_call_operand.vmem [shape: bf16[2,256,256], index: 4, kind: input, shape index: {}]
  %s5 = inlined_call_operand.vmem [shape: bf16[256,128], index: 5, kind: input, shape index: {}]
  %s6 = inlined_call_operand.vmem [shape: f32[1,128], index: 6, kind: input, shape index: {}]
  %s7 = inlined_call_operand.vmem [shape: bf16[128,128], index: 7, kind: input, shape index: {}]
  %s8 = inlined_call_operand.vmem [shape: f32[1,128], index: 8, kind: input, shape index: {}]
  %s9 = inlined_call_operand.vmem [shape: bf16[128,128], index: 9, kind: input, shape index: {}]
  %s10 = inlined_call_operand.vmem [shape: f32[2,100,128], index: 10, kind: output, shape index: {0}]
  %s11 = inlined_call_operand.vmem [shape: f32[2,100,128], index: 11, kind: output, shape index: {1}]
  %12 = xla_tuple %s10, %s11
  %s13 = sld [smem:[#allocation0]]
  $region89: #{metric_model_forward.3} parent=0
    _
  %s15 = ssub.s32 1, %s13
  %s16 = scalar_select 0, %s15, %s13
  loop: start=0, step=1, limit=4
  $region2: #{metric_model_forward.3} parent=0 // loop_pre_header
    _
  $region3: #{metric_model_forward.3} parent=0 // loop_header
    %s18 = sphi 0, %s22
    %p19 = scmp.ge.s32.totalorder %s18, 4
    %s25 = sphi 0, %s37
    %s26 = sphi 0, %s33
    %s27 = sphi 0, %s25
    %s28 = sphi 0, %s26
    %s29 = sphi 0, %s27
    %s30 = sphi 0, %s28
    %s38 = sphi 0, %s38
    %s40 = sphi 0, %s38
    %s41 = sphi 0, %s40
    %s55 = sphi 0, %s41
    %s59 = sphi 0, %s59
    %s61 = sphi 0, %s59
    %s62 = sphi 0, %s61
    %s76 = sphi 0, %s62
    %s84 = sphi 0, %s86
    %s87 = sphi 0, %s84
    %s88 = sphi 0, %s87
    %s104 = sphi 0, %s88
    %s112 = sphi 0, %s114
    %s115 = sphi 0, %s112
    %s116 = sphi 0, %s115
    %s132 = sphi 0, %s116
    %s140 = sphi 0, %s142
    %s143 = sphi 0, %s140
    %s144 = sphi 0, %s143
    %s160 = sphi 0, %s144
    %s164 = sphi 0, %s164
    %s166 = sphi 0, %s164
    %s167 = sphi 0, %s166
    %s181 = sphi 0, %s167
    %s185 = sphi 0, %s185
    %s187 = sphi 0, %s185
    %s188 = sphi 0, %s187
    %s202 = sphi 0, %s188
    %s206 = sphi 0, %s206
    %s208 = sphi 0, %s206
    %s209 = sphi 0, %s208
    %s223 = sphi 0, %s209
    %s227 = sphi 0, %s227
    %s229 = sphi 0, %s227
    %s230 = sphi 0, %s229
    %s244 = sphi 0, %s230
    %s248 = sphi 0, %s248
    %s250 = sphi 0, %s248
    %s251 = sphi 0, %s250
    %s265 = sphi 0, %s251
    %s271 = sphi 0, %s273
    %s274 = sphi 0, %s271
    %s275 = sphi 0, %s274
    %s291 = sphi 0, %s275
    %s297 = sphi 0, %s299
    %s300 = sphi 0, %s297
    %s301 = sphi 0, %s300
    %s317 = sphi 0, %s301
  $region4: #{metric_model_forward.3} parent=0 // loop_header_branch
    %21 = sbr.rel (%p19) target = $region8
  $region5: #{metric_model_forward.3} parent=0 // loop_body
    %s23 = ssub.s32 %s18, 1
    %s24 = ssub.s32 %s18, 2
    %s31 = sadd.s32 1, %s26
    %p32 = scmp.ge.s32.totalorder %s31, 1
    %s33 = scalar_select %p32, 0, %s31
    %s34 = sadd.s32 1, %s25
    %s35 = scalar_select %p32, %s34, %s25
    %p36 = scmp.ge.s32.totalorder %s35, 2
    %s37 = scalar_select %p36, 0, %s35
    %s39 = sadd.s32 %s38, 1
    %p42 = scmp.eq.s32.totalorder %s18, 1
    %p43 = scmp.ne.s32.totalorder %s38, %s40
    %p44 = scmp.eq.s32.totalorder %s18, 0
    %p45 = por %p43, %p44
    %p46 = scmp.ne.s32.totalorder %s38, %s40
    %p47 = scmp.eq.s32.totalorder %s23, 1
    %p48 = por %p46, %p47
    %p49 = scmp.ne.s32.totalorder %s40, %s41
    %p50 = scmp.eq.s32.totalorder %s23, 0
    %p51 = por %p49, %p50
    %p52 = scmp.ne.s32.totalorder %s40, %s41
    %p53 = scmp.eq.s32.totalorder %s24, 1
    %p54 = por %p52, %p53
    %p56 = scmp.ne.s32.totalorder %s41, %s55
    %p57 = scmp.eq.s32.totalorder %s24, 0
    %p58 = por %p56, %p57
    %s60 = sadd.s32 %s59, 1
    %p63 = scmp.eq.s32.totalorder %s18, 1
    %p64 = scmp.ne.s32.totalorder %s59, %s61
    %p65 = scmp.eq.s32.totalorder %s18, 0
    %p66 = por %p64, %p65
    %p67 = scmp.ne.s32.totalorder %s59, %s61
    %p68 = scmp.eq.s32.totalorder %s23, 1
    %p69 = por %p67, %p68
    %p70 = scmp.ne.s32.totalorder %s61, %s62
    %p71 = scmp.eq.s32.totalorder %s23, 0
    %p72 = por %p70, %p71
    %p73 = scmp.ne.s32.totalorder %s61, %s62
    %p74 = scmp.eq.s32.totalorder %s24, 1
    %p75 = por %p73, %p74
    %p77 = scmp.ne.s32.totalorder %s62, %s76
    %p78 = scmp.eq.s32.totalorder %s24, 0
    %p79 = por %p77, %p78
    %s80 = ssub.s32 %s25, %s37
    %s81 = ssub.s32 %s26, %s33
    %s82 = sor.u32 %s80, %s81
    %p83 = scmp.eq.s32.totalorder %s82, 0
    %s85 = sadd.s32 %s84, 1
    %s86 = scalar_select %p83, %s84, %s85
    %p89 = pneg %p83
    %p90 = scmp.eq.s32.totalorder %s18, 1
    %p91 = por %p89, %p90
    %p92 = scmp.ne.s32.totalorder %s84, %s87
    %p93 = scmp.eq.s32.totalorder %s18, 0
    %p94 = por %p92, %p93
    %p95 = scmp.ne.s32.totalorder %s84, %s87
    %p96 = scmp.eq.s32.totalorder %s23, 1
    %p97 = por %p95, %p96
    %p98 = scmp.ne.s32.totalorder %s87, %s88
    %p99 = scmp.eq.s32.totalorder %s23, 0
    %p100 = por %p98, %p99
    %p101 = scmp.ne.s32.totalorder %s87, %s88
    %p102 = scmp.eq.s32.totalorder %s24, 1
    %p103 = por %p101, %p102
    %p105 = scmp.ne.s32.totalorder %s88, %s104
    %p106 = scmp.eq.s32.totalorder %s24, 0
    %p107 = por %p105, %p106
    %s108 = ssub.s32 %s25, %s37
    %s109 = ssub.s32 %s26, %s33
    %s110 = sor.u32 %s108, %s109
    %p111 = scmp.eq.s32.totalorder %s110, 0
    %s113 = sadd.s32 %s112, 1
    %s114 = scalar_select %p111, %s112, %s113
    %p117 = pneg %p111
    %p118 = scmp.eq.s32.totalorder %s18, 1
    %p119 = por %p117, %p118
    %p120 = scmp.ne.s32.totalorder %s112, %s115
    %p121 = scmp.eq.s32.totalorder %s18, 0
    %p122 = por %p120, %p121
    %p123 = scmp.ne.s32.totalorder %s112, %s115
    %p124 = scmp.eq.s32.totalorder %s23, 1
    %p125 = por %p123, %p124
    %p126 = scmp.ne.s32.totalorder %s115, %s116
    %p127 = scmp.eq.s32.totalorder %s23, 0
    %p128 = por %p126, %p127
    %p129 = scmp.ne.s32.totalorder %s115, %s116
    %p130 = scmp.eq.s32.totalorder %s24, 1
    %p131 = por %p129, %p130
    %p133 = scmp.ne.s32.totalorder %s116, %s132
    %p134 = scmp.eq.s32.totalorder %s24, 0
    %p135 = por %p133, %p134
    %s136 = ssub.s32 %s25, %s37
    %s137 = ssub.s32 %s26, %s33
    %s138 = sor.u32 %s136, %s137
    %p139 = scmp.eq.s32.totalorder %s138, 0
    %s141 = sadd.s32 %s140, 1
    %s142 = scalar_select %p139, %s140, %s141
    %p145 = pneg %p139
    %p146 = scmp.eq.s32.totalorder %s18, 1
    %p147 = por %p145, %p146
    %p148 = scmp.ne.s32.totalorder %s140, %s143
    %p149 = scmp.eq.s32.totalorder %s18, 0
    %p150 = por %p148, %p149
    %p151 = scmp.ne.s32.totalorder %s140, %s143
    %p152 = scmp.eq.s32.totalorder %s23, 1
    %p153 = por %p151, %p152
    %p154 = scmp.ne.s32.totalorder %s143, %s144
    %p155 = scmp.eq.s32.totalorder %s23, 0
    %p156 = por %p154, %p155
    %p157 = scmp.ne.s32.totalorder %s143, %s144
    %p158 = scmp.eq.s32.totalorder %s24, 1
    %p159 = por %p157, %p158
    %p161 = scmp.ne.s32.totalorder %s144, %s160
    %p162 = scmp.eq.s32.totalorder %s24, 0
    %p163 = por %p161, %p162
    %s165 = sadd.s32 %s164, 1
    %p168 = scmp.eq.s32.totalorder %s18, 1
    %p169 = scmp.ne.s32.totalorder %s164, %s166
    %p170 = scmp.eq.s32.totalorder %s18, 0
    %p171 = por %p169, %p170
    %p172 = scmp.ne.s32.totalorder %s164, %s166
    %p173 = scmp.eq.s32.totalorder %s23, 1
    %p174 = por %p172, %p173
    %p175 = scmp.ne.s32.totalorder %s166, %s167
    %p176 = scmp.eq.s32.totalorder %s23, 0
    %p177 = por %p175, %p176
    %p178 = scmp.ne.s32.totalorder %s166, %s167
    %p179 = scmp.eq.s32.totalorder %s24, 1
    %p180 = por %p178, %p179
    %p182 = scmp.ne.s32.totalorder %s167, %s181
    %p183 = scmp.eq.s32.totalorder %s24, 0
    %p184 = por %p182, %p183
    %s186 = sadd.s32 %s185, 1
    %p189 = scmp.eq.s32.totalorder %s18, 1
    %p190 = scmp.ne.s32.totalorder %s185, %s187
    %p191 = scmp.eq.s32.totalorder %s18, 0
    %p192 = por %p190, %p191
    %p193 = scmp.ne.s32.totalorder %s185, %s187
    %p194 = scmp.eq.s32.totalorder %s23, 1
    %p195 = por %p193, %p194
    %p196 = scmp.ne.s32.totalorder %s187, %s188
    %p197 = scmp.eq.s32.totalorder %s23, 0
    %p198 = por %p196, %p197
    %p199 = scmp.ne.s32.totalorder %s187, %s188
    %p200 = scmp.eq.s32.totalorder %s24, 1
    %p201 = por %p199, %p200
    %p203 = scmp.ne.s32.totalorder %s188, %s202
    %p204 = scmp.eq.s32.totalorder %s24, 0
    %p205 = por %p203, %p204
    %s207 = sadd.s32 %s206, 1
    %p210 = scmp.eq.s32.totalorder %s18, 1
    %p211 = scmp.ne.s32.totalorder %s206, %s208
    %p212 = scmp.eq.s32.totalorder %s18, 0
    %p213 = por %p211, %p212
    %p214 = scmp.ne.s32.totalorder %s206, %s208
    %p215 = scmp.eq.s32.totalorder %s23, 1
    %p216 = por %p214, %p215
    %p217 = scmp.ne.s32.totalorder %s208, %s209
    %p218 = scmp.eq.s32.totalorder %s23, 0
    %p219 = por %p217, %p218
    %p220 = scmp.ne.s32.totalorder %s208, %s209
    %p221 = scmp.eq.s32.totalorder %s24, 1
    %p222 = por %p220, %p221
    %p224 = scmp.ne.s32.totalorder %s209, %s223
    %p225 = scmp.eq.s32.totalorder %s24, 0
    %p226 = por %p224, %p225
    %s228 = sadd.s32 %s227, 1
    %p231 = scmp.eq.s32.totalorder %s18, 1
    %p232 = scmp.ne.s32.totalorder %s227, %s229
    %p233 = scmp.eq.s32.totalorder %s18, 0
    %p234 = por %p232, %p233
    %p235 = scmp.ne.s32.totalorder %s227, %s229
    %p236 = scmp.eq.s32.totalorder %s23, 1
    %p237 = por %p235, %p236
    %p238 = scmp.ne.s32.totalorder %s229, %s230
    %p239 = scmp.eq.s32.totalorder %s23, 0
    %p240 = por %p238, %p239
    %p241 = scmp.ne.s32.totalorder %s229, %s230
    %p242 = scmp.eq.s32.totalorder %s24, 1
    %p243 = por %p241, %p242
    %p245 = scmp.ne.s32.totalorder %s230, %s244
    %p246 = scmp.eq.s32.totalorder %s24, 0
    %p247 = por %p245, %p246
    %s249 = sadd.s32 %s248, 1
    %p252 = scmp.eq.s32.totalorder %s18, 1
    %p253 = scmp.ne.s32.totalorder %s248, %s250
    %p254 = scmp.eq.s32.totalorder %s18, 0
    %p255 = por %p253, %p254
    %p256 = scmp.ne.s32.totalorder %s248, %s250
    %p257 = scmp.eq.s32.totalorder %s23, 1
    %p258 = por %p256, %p257
    %p259 = scmp.ne.s32.totalorder %s250, %s251
    %p260 = scmp.eq.s32.totalorder %s23, 0
    %p261 = por %p259, %p260
    %p262 = scmp.ne.s32.totalorder %s250, %s251
    %p263 = scmp.eq.s32.totalorder %s24, 1
    %p264 = por %p262, %p263
    %p266 = scmp.ne.s32.totalorder %s251, %s265
    %p267 = scmp.eq.s32.totalorder %s24, 0
    %p268 = por %p266, %p267
    %s269 = ssub.s32 %s25, %s37
    %p270 = scmp.eq.s32.totalorder %s269, 0
    %s272 = sadd.s32 %s271, 1
    %s273 = scalar_select %p270, %s271, %s272
    %p276 = pneg %p270
    %p277 = scmp.eq.s32.totalorder %s18, 1
    %p278 = por %p276, %p277
    %p279 = scmp.ne.s32.totalorder %s271, %s274
    %p280 = scmp.eq.s32.totalorder %s18, 0
    %p281 = por %p279, %p280
    %p282 = scmp.ne.s32.totalorder %s271, %s274
    %p283 = scmp.eq.s32.totalorder %s23, 1
    %p284 = por %p282, %p283
    %p285 = scmp.ne.s32.totalorder %s274, %s275
    %p286 = scmp.eq.s32.totalorder %s23, 0
    %p287 = por %p285, %p286
    %p288 = scmp.ne.s32.totalorder %s274, %s275
    %p289 = scmp.eq.s32.totalorder %s24, 1
    %p290 = por %p288, %p289
    %p292 = scmp.ne.s32.totalorder %s275, %s291
    %p293 = scmp.eq.s32.totalorder %s24, 0
    %p294 = por %p292, %p293
    %s295 = ssub.s32 %s25, %s37
    %p296 = scmp.eq.s32.totalorder %s295, 0
    %s298 = sadd.s32 %s297, 1
    %s299 = scalar_select %p296, %s297, %s298
    %p302 = pneg %p296
    %p303 = scmp.eq.s32.totalorder %s18, 1
    %p304 = por %p302, %p303
    %p305 = scmp.ne.s32.totalorder %s297, %s300
    %p306 = scmp.eq.s32.totalorder %s18, 0
    %p307 = por %p305, %p306
    %p308 = scmp.ne.s32.totalorder %s297, %s300
    %p309 = scmp.eq.s32.totalorder %s23, 1
    %p310 = por %p308, %p309
    %p311 = scmp.ne.s32.totalorder %s300, %s301
    %p312 = scmp.eq.s32.totalorder %s23, 0
    %p313 = por %p311, %p312
    %p314 = scmp.ne.s32.totalorder %s300, %s301
    %p315 = scmp.eq.s32.totalorder %s24, 1
    %p316 = por %p314, %p315
    %p318 = scmp.ne.s32.totalorder %s301, %s317
    %p319 = scmp.eq.s32.totalorder %s24, 0
    %p320 = por %p318, %p319
    %p321 = scmp.le.s32.totalorder 1, %s18
    %p322 = scmp.lt.s32.totalorder %s18, 3
    %p323 = pnand %p321, %p322
    %p324 = pneg %p323
    // Predicated region
    $region9: #{metric_model_forward.3} parent=5 // pred_check
      _
    $region10: #{metric_model_forward.3} parent=5 // pred_check_branch
      %326 = sbr.rel (%p323) target = $region12
    $region11: #{metric_model_forward.3} parent=5 // pred_region
      %s327 = ssub.s32 %s18, 1
      // Predicated region
      $region13: #{metric_model_forward.3} parent=11 // pred_check
        %p328 = pneg %p51
      $region14: #{metric_model_forward.3} parent=11 // pred_check_branch
        %330 = sbr.rel (%p328) target = $region16
      $region15: #{metric_model_forward.3} parent=11 // pred_region
        _
      $region16: #{metric_model_forward.3} parent=11 // pred_fallthru
        _
      // Predicated region
      $region17: #{metric_model_forward.3} parent=11 // pred_check
        %p331 = pneg %p72
      $region18: #{metric_model_forward.3} parent=11 // pred_check_branch
        %333 = sbr.rel (%p331) target = $region20
      $region19: #{metric_model_forward.3} parent=11 // pred_region
        _
      $region20: #{metric_model_forward.3} parent=11 // pred_fallthru
        _
      // Predicated region
      $region21: #{metric_model_forward.3} parent=11 // pred_check
        %p334 = pneg %p177
      $region22: #{metric_model_forward.3} parent=11 // pred_check_branch
        %336 = sbr.rel (%p334) target = $region24
      $region23: #{metric_model_forward.3} parent=11 // pred_region
        _
      $region24: #{metric_model_forward.3} parent=11 // pred_fallthru
        _
      // Predicated region
      $region25: #{metric_model_forward.3} parent=11 // pred_check
        %p337 = pneg %p198
      $region26: #{metric_model_forward.3} parent=11 // pred_check_branch
        %339 = sbr.rel (%p337) target = $region28
      $region27: #{metric_model_forward.3} parent=11 // pred_region
        _
      $region28: #{metric_model_forward.3} parent=11 // pred_fallthru
        _
      // Predicated region
      $region29: #{metric_model_forward.3} parent=11 // pred_check
        %p340 = pneg %p219
      $region30: #{metric_model_forward.3} parent=11 // pred_check_branch
        %342 = sbr.rel (%p340) target = $region32
      $region31: #{metric_model_forward.3} parent=11 // pred_region
        _
      $region32: #{metric_model_forward.3} parent=11 // pred_fallthru
        _
      // Predicated region
      $region33: #{metric_model_forward.3} parent=11 // pred_check
        %p343 = pneg %p240
      $region34: #{metric_model_forward.3} parent=11 // pred_check_branch
        %345 = sbr.rel (%p343) target = $region36
      $region35: #{metric_model_forward.3} parent=11 // pred_region
        _
      $region36: #{metric_model_forward.3} parent=11 // pred_fallthru
        _
      // Predicated region
      $region37: #{metric_model_forward.3} parent=11 // pred_check
        %p346 = pneg %p261
      $region38: #{metric_model_forward.3} parent=11 // pred_check_branch
        %348 = sbr.rel (%p346) target = $region40
      $region39: #{metric_model_forward.3} parent=11 // pred_region
        _
      $region40: #{metric_model_forward.3} parent=11 // pred_fallthru
        _
    $region12: #{metric_model_forward.3} parent=5 // pred_fallthru
      _
    %p349 = scmp.lt.s32.totalorder %s18, 2
    // Predicated region
    $region41: #{metric_model_forward.3} parent=5 // pred_check
      %p350 = pneg %p349
    $region42: #{metric_model_forward.3} parent=5 // pred_check_branch
      %352 = sbr.rel (%p350) target = $region44
    $region43: #{metric_model_forward.3} parent=5 // pred_region
      // Predicated region
      $region45: #{metric_model_forward.3} parent=43 // pred_check
        %p353 = pneg %p94
      $region46: #{metric_model_forward.3} parent=43 // pred_check_branch
        %355 = sbr.rel (%p353) target = $region48
      $region47: #{metric_model_forward.3} parent=43 // pred_region
        %s356 = smul.u32 2, %s26
        %p357 = scmp.lt.s32.totalorder %s25, 1
        %s358 = scalar_select %p357, %s25, 1
        %p359 = scmp.lt.s32.totalorder %s356, 1
        %s360 = scalar_select %p359, %s356, 1
        %s361 = smul.addr %s358, 4
        %s362 = sadd.s32 %s360, %s361
        %s363 = smul.addr %s362, 4
        %s364 = scalar_lea.vmem %s2, %s363
        %s365 = smul.u32 2, %s26
      $region48: #{metric_model_forward.3} parent=43 // pred_fallthru
        _
      // Predicated region
      $region49: #{metric_model_forward.3} parent=43 // pred_check
        %p366 = pneg %p122
      $region50: #{metric_model_forward.3} parent=43 // pred_check_branch
        %368 = sbr.rel (%p366) target = $region52
      $region51: #{metric_model_forward.3} parent=43 // pred_region
        %s369 = smul.u32 2, %s26
        %p370 = scmp.lt.s32.totalorder %s25, 1
        %s371 = scalar_select %p370, %s25, 1
        %p372 = scmp.lt.s32.totalorder %s369, 1
        %s373 = scalar_select %p372, %s369, 1
        %s374 = smul.addr %s371, 4
        %s375 = sadd.s32 %s373, %s374
        %s376 = smul.addr %s375, 4
        %s377 = scalar_lea.vmem %s3, %s376
        %s378 = smul.u32 2, %s26
      $region52: #{metric_model_forward.3} parent=43 // pred_fallthru
        _
      // Predicated region
      $region53: #{metric_model_forward.3} parent=43 // pred_check
        %p379 = pneg %p150
      $region54: #{metric_model_forward.3} parent=43 // pred_check_branch
        %381 = sbr.rel (%p379) target = $region56
      $region55: #{metric_model_forward.3} parent=43 // pred_region
        %s382 = smul.u32 2, %s26
        %p383 = scmp.lt.s32.totalorder %s25, 1
        %s384 = scalar_select %p383, %s25, 1
        %p385 = scmp.lt.s32.totalorder %s382, 1
        %s386 = scalar_select %p385, %s382, 1
        %s387 = smul.addr %s384, 64
        %s388 = sadd.s32 %s386, %s387
        %s389 = smul.addr %s388, 4
        %s390 = scalar_lea.vmem %s4, %s389
        %s391 = smul.u32 2, %s26
      $region56: #{metric_model_forward.3} parent=43 // pred_fallthru
        _
    $region44: #{metric_model_forward.3} parent=5 // pred_fallthru
      _
    %p392 = scmp.le.s32.totalorder 1, %s18
    %p393 = scmp.lt.s32.totalorder %s18, 3
    %p394 = pnand %p392, %p393
    %p395 = pneg %p394
    // Predicated region
    $region57: #{metric_model_forward.3} parent=5 // pred_check
      _
    $region58: #{metric_model_forward.3} parent=5 // pred_check_branch
      %397 = sbr.rel (%p394) target = $region60
    $region59: #{metric_model_forward.3} parent=5 // pred_region
      %s398 = ssub.s32 %s18, 1
      %p399 = pneg %p51
      %p400 = pneg %p48
      %p401 = pneg %p72
      %p402 = pneg %p69
      %s403 = smul.u32 2, %s28
      %p404 = scmp.lt.s32.totalorder %s27, 1
      %s405 = scalar_select %p404, %s27, 1
      %p406 = scmp.lt.s32.totalorder %s403, 1
      %s407 = scalar_select %p406, %s403, 1
      %s408 = smul.addr %s405, 4
      %s409 = sadd.s32 %s407, %s408
      %s410 = smul.addr %s409, 4
      %s411 = scalar_lea.vmem %s2, %s410
      %p412 = pneg %p100
      %p413 = pneg %p97
      %s414 = smul.u32 2, %s28
      %p415 = scmp.lt.s32.totalorder %s27, 1
      %s416 = scalar_select %p415, %s27, 1
      %p417 = scmp.lt.s32.totalorder %s414, 1
      %s418 = scalar_select %p417, %s414, 1
      %s419 = smul.addr %s416, 4
      %s420 = sadd.s32 %s418, %s419
      %s421 = smul.addr %s420, 4
      %s422 = scalar_lea.vmem %s3, %s421
      %p423 = pneg %p128
      %p424 = pneg %p125
      %s425 = smul.u32 2, %s28
      %p426 = scmp.lt.s32.totalorder %s27, 1
      %s427 = scalar_select %p426, %s27, 1
      %p428 = scmp.lt.s32.totalorder %s425, 1
      %s429 = scalar_select %p428, %s425, 1
      %s430 = smul.addr %s427, 64
      %s431 = sadd.s32 %s429, %s430
      %s432 = smul.addr %s431, 4
      %s433 = scalar_lea.vmem %s4, %s432
      %p434 = pneg %p156
      %p435 = pneg %p153
      %p436 = pneg %p177
      %p437 = pneg %p174
      %p438 = pneg %p198
      %p439 = pneg %p195
      %p440 = pneg %p219
      %p441 = pneg %p216
      %p442 = pneg %p240
      %p443 = pneg %p237
      %p444 = pneg %p261
      %p445 = pneg %p258
      %p446 = pneg %p287
      %p447 = pneg %p284
      %p448 = scmp.lt.s32.totalorder %s27, 1
      %s449 = scalar_select %p448, %s27, 1
      %s450 = smul.addr %s449, 13
      %s451 = smul.addr %s450, 8
      %s452 = scalar_lea.vmem %s10, %s451
      %p453 = pneg %p313
      %p454 = pneg %p310
      %p455 = scmp.lt.s32.totalorder %s27, 1
      %s456 = scalar_select %p455, %s27, 1
      %s457 = smul.addr %s456, 13
      %s458 = smul.addr %s457, 8
      %s459 = scalar_lea.vmem %s11, %s458
      %s460 = smul.u32 2, %s28
      %p461 = scmp.lt.s32.totalorder %s27, 1
      %s462 = scalar_select %p461, %s27, 1
      %p463 = scmp.lt.s32.totalorder %s460, 1
      %s464 = scalar_select %p463, %s460, 1
      %s465 = smul.addr %s462, 4
      %s466 = sadd.s32 %s464, %s465
      %s467 = smul.addr %s466, 4
      %s468 = scalar_lea.vmem %s2, %s467
      %s469 = smul.u32 2, %s28
      %s470 = smul.u32 2, %s28
      %p471 = scmp.lt.s32.totalorder %s27, 1
      %s472 = scalar_select %p471, %s27, 1
      %p473 = scmp.lt.s32.totalorder %s470, 1
      %s474 = scalar_select %p473, %s470, 1
      %s475 = smul.addr %s472, 4
      %s476 = sadd.s32 %s474, %s475
      %s477 = smul.addr %s476, 4
      %s478 = scalar_lea.vmem %s3, %s477
      %s479 = smul.u32 2, %s28
      %s480 = smul.u32 2, %s28
      %p481 = scmp.lt.s32.totalorder %s27, 1
      %s482 = scalar_select %p481, %s27, 1
      %p483 = scmp.lt.s32.totalorder %s480, 1
      %s484 = scalar_select %p483, %s480, 1
      %s485 = smul.addr %s482, 64
      %s486 = sadd.s32 %s484, %s485
      %s487 = smul.addr %s486, 4
      %s488 = scalar_lea.vmem %s4, %s487
      %s489 = smul.u32 2, %s28
      %p490 = scmp.lt.s32.totalorder %s27, 1
      %s491 = scalar_select %p490, %s27, 1
      %s492 = smul.addr %s491, 13
      %s493 = smul.addr %s492, 8
      %s494 = scalar_lea.vmem %s10, %s493
      %p495 = scmp.lt.s32.totalorder %s27, 1
      %s496 = scalar_select %p495, %s27, 1
      %s497 = smul.addr %s496, 13
      %s498 = smul.addr %s497, 8
      %s499 = scalar_lea.vmem %s11, %s498
      %p501 = scmp.eq.s32.totalorder %s28, 0
      // Predicated region
      $region61: #{metric_model_forward.3} parent=59 // pred_check
        %p502 = pneg %p501
      $region62: #{metric_model_forward.3} parent=59 // pred_check_branch
        %504 = sbr.rel (%p502) target = $region64
      $region63: #{metric_model_forward.3} parent=59 // pred_region
        %505 = vst [vmem:[#allocation2] sm:$0xff] 0.0
        %506 = vst [vmem:[#allocation2 + $0x8] sm:$0xff] 0.0
        %507 = vst [vmem:[#allocation2 + $0x10] sm:$0xff] 0.0
        %508 = vst [vmem:[#allocation2 + $0x18] sm:$0xff] 0.0
        %509 = vst [vmem:[#allocation2 + $0x20] sm:$0xff] 0.0
        %510 = vst [vmem:[#allocation2 + $0x28] sm:$0xff] 0.0
        %511 = vst [vmem:[#allocation2 + $0x30] sm:$0xff] 0.0
        %512 = vst [vmem:[#allocation2 + $0x38] sm:$0xff] 0.0
        %513 = vst [vmem:[#allocation2 + $0x40] sm:$0xff] 0.0
        %514 = vst [vmem:[#allocation2 + $0x48] sm:$0xff] 0.0
        %515 = vst [vmem:[#allocation2 + $0x50] sm:$0xff] 0.0
        %516 = vst [vmem:[#allocation2 + $0x58] sm:$0xff] 0.0
        %517 = vst [vmem:[#allocation2 + $0x60] sm:$0xff] 0.0
        %518 = vst [vmem:[#allocation2 + $0x68] sm:$0xff] 0.0
        %519 = vst [vmem:[#allocation2 + $0x70] sm:$0xff] 0.0
        %520 = vst [vmem:[#allocation2 + $0x78] sm:$0xff] 0.0
        %521 = vst [vmem:[#allocation2 + $0x80] sm:$0xff] 0.0
        %522 = vst [vmem:[#allocation2 + $0x88] sm:$0xff] 0.0
        %523 = vst [vmem:[#allocation2 + $0x90] sm:$0xff] 0.0
        %524 = vst [vmem:[#allocation2 + $0x98] sm:$0xff] 0.0
        %525 = vst [vmem:[#allocation2 + $0xa0] sm:$0xff] 0.0
        %526 = vst [vmem:[#allocation2 + $0xa8] sm:$0xff] 0.0
        %527 = vst [vmem:[#allocation2 + $0xb0] sm:$0xff] 0.0
        %528 = vst [vmem:[#allocation2 + $0xb8] sm:$0xff] 0.0
        %529 = vst [vmem:[#allocation2 + $0xc0] sm:$0xf] 0.0
        %530 = vst [vmem:[#allocation2 + $0xc8] sm:$0xf] 0.0
        %vm531 = vcmask 7168
        %532 = vst.msk [vmem:[#allocation3] sm:$0xff] %vm531, 0.0
        %533 = vst.msk [vmem:[#allocation3 + $0x8] sm:$0xff] %vm531, 0.0
        %534 = vst.msk [vmem:[#allocation3 + $0x10] sm:$0xff] %vm531, 0.0
        %535 = vst.msk [vmem:[#allocation3 + $0x18] sm:$0xff] %vm531, 0.0
        %536 = vst.msk [vmem:[#allocation3 + $0x20] sm:$0xff] %vm531, 0.0
        %537 = vst.msk [vmem:[#allocation3 + $0x28] sm:$0xff] %vm531, 0.0
        %538 = vst.msk [vmem:[#allocation3 + $0x30] sm:$0xff] %vm531, 0.0
        %539 = vst.msk [vmem:[#allocation3 + $0x38] sm:$0xff] %vm531, 0.0
        %540 = vst.msk [vmem:[#allocation3 + $0x40] sm:$0xff] %vm531, 0.0
        %541 = vst.msk [vmem:[#allocation3 + $0x48] sm:$0xff] %vm531, 0.0
        %542 = vst.msk [vmem:[#allocation3 + $0x50] sm:$0xff] %vm531, 0.0
        %543 = vst.msk [vmem:[#allocation3 + $0x58] sm:$0xff] %vm531, 0.0
        %vm544 = vcmask 3072
        %545 = vst.msk [vmem:[#allocation3 + $0x60] sm:$0xf] %vm544, 0.0
      $region64: #{metric_model_forward.3} parent=59 // pred_fallthru
        _
      %v546 = vld [vmem:[%s0] sm:$0xf]
      %v547 = vld [vmem:[%s0 + $0x4] sm:$0xf]
      %v548 = vld [vmem:[%s0 + $0x8] sm:$0xf]
      %v549 = vld [vmem:[%s0 + $0xc] sm:$0xf]
      %v550 = vld [vmem:[%s0 + $0x10] sm:$0xf]
      %v551 = vld [vmem:[%s0 + $0x14] sm:$0xf]
      %v552 = vld [vmem:[%s0 + $0x18] sm:$0xf]
      %v553 = vld [vmem:[%s0 + $0x1c] sm:$0xf]
      %v554 = vld [vmem:[%s0 + $0x20] sm:$0xf]
      %v555 = vld [vmem:[%s0 + $0x24] sm:$0xf]
      %v556 = vld [vmem:[%s0 + $0x28] sm:$0xf]
      %v557 = vld [vmem:[%s0 + $0x2c] sm:$0xf]
      %v558 = vld [vmem:[%s0 + $0x30] sm:$0x3]
      %v559 = vld [vmem:[%s478] sm:$0xff]
      %v560 = vld [vmem:[%s478 + $0x8] sm:$0x11]
      %v574 = vunpack.c.l.b16 %v546
      %v575 = vunpack.c.l.b16 %v547
      %v576 = vunpack.c.l.b16 %v548
      %v577 = vunpack.c.l.b16 %v549
      %v578 = vunpack.c.l.b16 %v550
      %v579 = vunpack.c.l.b16 %v551
      %v580 = vunpack.c.l.b16 %v552
      %v581 = vunpack.c.l.b16 %v553
      %v582 = vunpack.c.l.b16 %v554
      %v583 = vunpack.c.l.b16 %v555
      %v584 = vunpack.c.l.b16 %v556
      %v585 = vunpack.c.l.b16 %v557
      %v586 = vunpack.c.l.b16 %v558
      %v587 = vpack.c.b16 %v575, %v574
      %v588 = vpack.c.b16 %v577, %v576
      %v589 = vpack.c.b16 %v579, %v578
      %v590 = vpack.c.b16 %v581, %v580
      %v591 = vpack.c.b16 %v583, %v582
      %v592 = vpack.c.b16 %v585, %v584
      %v593 = vpack.c.b16 %v586, %v586
      %v596 = vunpack.c.l.b16 %v559
      %v597 = vunpack.c.h.b16 %v559
      %v598 = vunpack.c.l.b16 %v560
      %v599 = vunpack.c.h.b16 %v560
      %v600 = vpack.c.b16 %v598, %v596
      %v601 = vpack.c.b16 %v599, %v597
      %vm602 = vcmask 80896
      %v604 = vsel %vm602, %v587, 0
      %v607 = vsel %vm602, %v588, 0
      %v610 = vsel %vm602, %v589, 0
      %v613 = vsel %vm602, %v590, 0
      %v616 = vsel %vm602, %v591, 0
      %v619 = vsel %vm602, %v592, 0
      %v622 = vsel %vm602, %v593, 0
      %vm624 = vcmask 1044480
      %v626 = vsel %vm624, %v600, 0
      %v629 = vsel %vm624, %v601, 0
      %631 = vmatprep.subr.bf16.mxu0 %v629
      %632 = vmatpush1.bf16.msra.mxu0 %v626
      %633 = vmatprep.subr.bf16.mxu0 0
      %634 = vmatpush1.bf16.msra.mxu0 0
      %635 = vmatprep.subr.bf16.mxu0 0
      %636 = vmatpush1.bf16.msra.mxu0 0
      %637 = vmatprep.subr.bf16.mxu0 0
      %638 = vmatpush1.bf16.msra.mxu0 0
      %639 = vmatprep.subr.bf16.mxu0 0
      %640 = vmatpush1.bf16.msra.mxu0 0
      %641 = vmatprep.subr.bf16.mxu0 0
      %642 = vmatpush1.bf16.msra.mxu0 0
      %643 = vmatprep.subr.bf16.mxu0 0
      %644 = vmatpush1.bf16.msra.mxu0 0
      %645 = vmatprep.subr.bf16.mxu0 0
      %646 = vmatpush1.bf16.msra.mxu0 0
      %647 = vmatprep.subr.bf16.mxu0 0
      %648 = vmatpush1.bf16.msra.mxu0 0
      %649 = vmatprep.subr.bf16.mxu0 0
      %650 = vmatpush1.bf16.msra.mxu0 0
      %651 = vmatprep.subr.bf16.mxu0 0
      %652 = vmatpush1.bf16.msra.mxu0 0
      %653 = vmatprep.subr.bf16.mxu0 0
      %654 = vmatpush1.bf16.msra.mxu0 0
      %655 = vmatprep.subr.bf16.mxu0 0
      %656 = vmatpush1.bf16.msra.mxu0 0
      %657 = vmatprep.subr.bf16.mxu0 0
      %658 = vmatpush1.bf16.msra.mxu0 0
      %659 = vmatprep.subr.bf16.mxu0 0
      %660 = vmatpush1.bf16.msra.mxu0 0
      %661 = vmatprep.subr.bf16.mxu0 0
      %662 = vmatpush1.bf16.msra.mxu0 0
      %663 = vmatprep.mubr.bf16.mxu0 0
      %664 = vmatmul.mubr.bf16.gmra.mrb[0].mxu0 %v604
      %v665 = vpop.f32.mrb[0].mxu0
      %v666 = vadd.f32 0.0, %v665
      %v667 = vpop.f32.mrb[0].mxu0
      %v668 = vadd.f32 0.0, %v667
      %v669 = vpop.f32.mrb[0].mxu0
      %v670 = vadd.f32 0.0, %v669
      %v671 = vpop.f32.mrb[0].mxu0
      %v672 = vadd.f32 0.0, %v671
      %673 = vmatprep.mubr.bf16.mxu0 0
      %674 = vmatmul.mubr.bf16.gmra.mrb[0].mxu0 %v607
      %v675 = vpop.f32.mrb[0].mxu0
      %v676 = vadd.f32 0.0, %v675
      %v677 = vpop.f32.mrb[0].mxu0
      %v678 = vadd.f32 0.0, %v677
      %v679 = vpop.f32.mrb[0].mxu0
      %v680 = vadd.f32 0.0, %v679
      %v681 = vpop.f32.mrb[0].mxu0
      %v682 = vadd.f32 0.0, %v681
      %683 = vmatprep.mubr.bf16.mxu0 0
      %684 = vmatmul.mubr.bf16.gmra.mrb[0].mxu0 %v610
      %v685 = vpop.f32.mrb[0].mxu0
      %v686 = vadd.f32 0.0, %v685
      %v687 = vpop.f32.mrb[0].mxu0
      %v688 = vadd.f32 0.0, %v687
      %v689 = vpop.f32.mrb[0].mxu0
      %v690 = vadd.f32 0.0, %v689
      %v691 = vpop.f32.mrb[0].mxu0
      %v692 = vadd.f32 0.0, %v691
      %693 = vmatprep.mubr.bf16.mxu0 0
      %694 = vmatmul.mubr.bf16.gmra.mrb[0].mxu0 %v613
      %v695 = vpop.f32.mrb[0].mxu0
      %v696 = vadd.f32 0.0, %v695
      %v697 = vpop.f32.mrb[0].mxu0
      %v698 = vadd.f32 0.0, %v697
      %v699 = vpop.f32.mrb[0].mxu0
      %v700 = vadd.f32 0.0, %v699
      %v701 = vpop.f32.mrb[0].mxu0
      %v702 = vadd.f32 0.0, %v701
      %703 = vmatprep.mubr.bf16.mxu0 0
      %704 = vmatmul.mubr.bf16.gmra.mrb[0].mxu0 %v616
      %v705 = vpop.f32.mrb[0].mxu0
      %v706 = vadd.f32 0.0, %v705
      %v707 = vpop.f32.mrb[0].mxu0
      %v708 = vadd.f32 0.0, %v707
      %v709 = vpop.f32.mrb[0].mxu0
      %v710 = vadd.f32 0.0, %v709
      %v711 = vpop.f32.mrb[0].mxu0
      %v712 = vadd.f32 0.0, %v711
      %713 = vmatprep.mubr.bf16.mxu0 0
      %714 = vmatmul.mubr.bf16.gmra.mrb[0].mxu0 %v619
      %v715 = vpop.f32.mrb[0].mxu0
      %v716 = vadd.f32 0.0, %v715
      %v717 = vpop.f32.mrb[0].mxu0
      %v718 = vadd.f32 0.0, %v717
      %v719 = vpop.f32.mrb[0].mxu0
      %v720 = vadd.f32 0.0, %v719
      %v721 = vpop.f32.mrb[0].mxu0
      %v722 = vadd.f32 0.0, %v721
      %723 = vmatprep.mubr.bf16.mxu0 0
      %724 = vmatmul.mubr.bf16.gmra.mrb[0].mxu0 %v622
      %v725 = vpop.f32.mrb[0].mxu0
      %v726 = vadd.f32 0.0, %v725
      %v727 = vpop.f32.mrb[0].mxu0
      %v728 = vadd.f32 0.0, %v727
      %v729 = vpop.f32.mrb[0].mxu0
      %v730 = vpop.f32.mrb[0].mxu0
      %731 = vdwg.mxu0
      %v732 = vld [vmem:[%s1] sm:$0xf]
      %v733 = vld [vmem:[%s1 + $0x4] sm:$0xf]
      %v734 = vld [vmem:[%s1 + $0x8] sm:$0xf]
      %v735 = vld [vmem:[%s1 + $0xc] sm:$0xf]
      %v736 = vld [vmem:[%s1 + $0x10] sm:$0xf]
      %v737 = vld [vmem:[%s1 + $0x14] sm:$0xf]
      %v738 = vld [vmem:[%s1 + $0x18] sm:$0xf]
      %v739 = vld [vmem:[%s1 + $0x1c] sm:$0xf]
      %v740 = vld [vmem:[%s1 + $0x20] sm:$0xf]
      %v741 = vld [vmem:[%s1 + $0x24] sm:$0xf]
      %v742 = vld [vmem:[%s1 + $0x28] sm:$0xf]
      %v743 = vld [vmem:[%s1 + $0x2c] sm:$0xf]
      %v744 = vld [vmem:[%s1 + $0x30] sm:$0x3]
      %v745 = vld [vmem:[%s468] sm:$0xff]
      %v746 = vld [vmem:[%s468 + $0x8] sm:$0x11]
      %v760 = vunpack.c.l.b16 %v732
      %v761 = vunpack.c.l.b16 %v733
      %v762 = vunpack.c.l.b16 %v734
      %v763 = vunpack.c.l.b16 %v735
      %v764 = vunpack.c.l.b16 %v736
      %v765 = vunpack.c.l.b16 %v737
      %v766 = vunpack.c.l.b16 %v738
      %v767 = vunpack.c.l.b16 %v739
      %v768 = vunpack.c.l.b16 %v740
      %v769 = vunpack.c.l.b16 %v741
      %v770 = vunpack.c.l.b16 %v742
      %v771 = vunpack.c.l.b16 %v743
      %v772 = vunpack.c.l.b16 %v744
      %v773 = vpack.c.b16 %v761, %v760
      %v774 = vpack.c.b16 %v763, %v762
      %v775 = vpack.c.b16 %v765, %v764
      %v776 = vpack.c.b16 %v767, %v766
      %v777 = vpack.c.b16 %v769, %v768
      %v778 = vpack.c.b16 %v771, %v770
      %v779 = vpack.c.b16 %v772, %v772
      %v782 = vunpack.c.l.b16 %v745
      %v783 = vunpack.c.h.b16 %v745
      %v784 = vunpack.c.l.b16 %v746
      %v785 = vunpack.c.h.b16 %v746
      %v786 = vpack.c.b16 %v784, %v782
      %v787 = vpack.c.b16 %v785, %v783
      %v789 = vsel %vm602, %v773, 0
      %v792 = vsel %vm602, %v774, 0
      %v795 = vsel %vm602, %v775, 0
      %v798 = vsel %vm602, %v776, 0
      %v801 = vsel %vm602, %v777, 0
      %v804 = vsel %vm602, %v778, 0
      %v807 = vsel %vm602, %v779, 0
      %v810 = vsel %vm624, %v786, 0
      %v813 = vsel %vm624, %v787, 0
      %815 = vmatprep.subr.bf16.mxu0 %v813
      %816 = vmatpush1.bf16.msra.mxu0 %v810
      %817 = vmatprep.subr.bf16.mxu0 0
      %818 = vmatpush1.bf16.msra.mxu0 0
      %819 = vmatprep.subr.bf16.mxu0 0
      %820 = vmatpush1.bf16.msra.mxu0 0
      %821 = vmatprep.subr.bf16.mxu0 0
      %822 = vmatpush1.bf16.msra.mxu0 0
      %823 = vmatprep.subr.bf16.mxu0 0
      %824 = vmatpush1.bf16.msra.mxu0 0
      %825 = vmatprep.subr.bf16.mxu0 0
      %826 = vmatpush1.bf16.msra.mxu0 0
      %827 = vmatprep.subr.bf16.mxu0 0
      %828 = vmatpush1.bf16.msra.mxu0 0
      %829 = vmatprep.subr.bf16.mxu0 0
      %830 = vmatpush1.bf16.msra.mxu0 0
      %831 = vmatprep.subr.bf16.mxu0 0
      %832 = vmatpush1.bf16.msra.mxu0 0
      %833 = vmatprep.subr.bf16.mxu0 0
      %834 = vmatpush1.bf16.msra.mxu0 0
      %835 = vmatprep.subr.bf16.mxu0 0
      %836 = vmatpush1.bf16.msra.mxu0 0
      %837 = vmatprep.subr.bf16.mxu0 0
      %838 = vmatpush1.bf16.msra.mxu0 0
      %839 = vmatprep.subr.bf16.mxu0 0
      %840 = vmatpush1.bf16.msra.mxu0 0
      %841 = vmatprep.subr.bf16.mxu0 0
      %842 = vmatpush1.bf16.msra.mxu0 0
      %843 = vmatprep.subr.bf16.mxu0 0
      %844 = vmatpush1.bf16.msra.mxu0 0
      %845 = vmatprep.subr.bf16.mxu0 0
      %846 = vmatpush1.bf16.msra.mxu0 0
      %847 = vmatprep.mubr.bf16.mxu0 0
      %848 = vmatmul.mubr.bf16.gmra.mrb[0].mxu0 %v789
      %v849 = vpop.f32.mrb[0].mxu0
      %v850 = vadd.f32 0.0, %v849
      %v851 = vpop.f32.mrb[0].mxu0
      %v852 = vadd.f32 0.0, %v851
      %v853 = vpop.f32.mrb[0].mxu0
      %v854 = vadd.f32 0.0, %v853
      %v855 = vpop.f32.mrb[0].mxu0
      %v856 = vadd.f32 0.0, %v855
      %857 = vmatprep.mubr.bf16.mxu0 0
      %858 = vmatmul.mubr.bf16.gmra.mrb[0].mxu0 %v792
      %v859 = vpop.f32.mrb[0].mxu0
      %v860 = vadd.f32 0.0, %v859
      %v861 = vpop.f32.mrb[0].mxu0
      %v862 = vadd.f32 0.0, %v861
      %v863 = vpop.f32.mrb[0].mxu0
      %v864 = vadd.f32 0.0, %v863
      %v865 = vpop.f32.mrb[0].mxu0
      %v866 = vadd.f32 0.0, %v865
      %867 = vmatprep.mubr.bf16.mxu0 0
      %868 = vmatmul.mubr.bf16.gmra.mrb[0].mxu0 %v795
      %v869 = vpop.f32.mrb[0].mxu0
      %v870 = vadd.f32 0.0, %v869
      %v871 = vpop.f32.mrb[0].mxu0
      %v872 = vadd.f32 0.0, %v871
      %v873 = vpop.f32.mrb[0].mxu0
      %v874 = vadd.f32 0.0, %v873
      %v875 = vpop.f32.mrb[0].mxu0
      %v876 = vadd.f32 0.0, %v875
      %877 = vmatprep.mubr.bf16.mxu0 0
      %878 = vmatmul.mubr.bf16.gmra.mrb[0].mxu0 %v798
      %v879 = vpop.f32.mrb[0].mxu0
      %v880 = vadd.f32 0.0, %v879
      %v881 = vpop.f32.mrb[0].mxu0
      %v882 = vadd.f32 0.0, %v881
      %v883 = vpop.f32.mrb[0].mxu0
      %v884 = vadd.f32 0.0, %v883
      %v885 = vpop.f32.mrb[0].mxu0
      %v886 = vadd.f32 0.0, %v885
      %887 = vmatprep.mubr.bf16.mxu0 0
      %888 = vmatmul.mubr.bf16.gmra.mrb[0].mxu0 %v801
      %v889 = vpop.f32.mrb[0].mxu0
      %v890 = vadd.f32 0.0, %v889
      %v891 = vpop.f32.mrb[0].mxu0
      %v892 = vadd.f32 0.0, %v891
      %v893 = vpop.f32.mrb[0].mxu0
      %v894 = vadd.f32 0.0, %v893
      %v895 = vpop.f32.mrb[0].mxu0
      %v896 = vadd.f32 0.0, %v895
      %897 = vmatprep.mubr.bf16.mxu0 0
      %898 = vmatmul.mubr.bf16.gmra.mrb[0].mxu0 %v804
      %v899 = vpop.f32.mrb[0].mxu0
      %v900 = vadd.f32 0.0, %v899
      %v901 = vpop.f32.mrb[0].mxu0
      %v902 = vadd.f32 0.0, %v901
      %v903 = vpop.f32.mrb[0].mxu0
      %v904 = vadd.f32 0.0, %v903
      %v905 = vpop.f32.mrb[0].mxu0
      %v906 = vadd.f32 0.0, %v905
      %907 = vmatprep.mubr.bf16.mxu0 0
      %908 = vmatmul.mubr.bf16.gmra.mrb[0].mxu0 %v807
      %v909 = vpop.f32.mrb[0].mxu0
      %v910 = vadd.f32 0.0, %v909
      %v911 = vpop.f32.mrb[0].mxu0
      %v912 = vadd.f32 0.0, %v911
      %v913 = vpop.f32.mrb[0].mxu0
      %v914 = vpop.f32.mrb[0].mxu0
      %915 = vdwg.mxu0
      %v916 = vmul.f32 %v666, %v850
      %v917 = vmul.f32 %v668, %v852
      %v918 = vmul.f32 %v670, %v854
      %v919 = vmul.f32 %v672, %v856
      %v920 = vmul.f32 %v676, %v860
      %v921 = vmul.f32 %v678, %v862
      %v922 = vmul.f32 %v680, %v864
      %v923 = vmul.f32 %v682, %v866
      %v924 = vmul.f32 %v686, %v870
      %v925 = vmul.f32 %v688, %v872
      %v926 = vmul.f32 %v690, %v874
      %v927 = vmul.f32 %v692, %v876
      %v928 = vmul.f32 %v696, %v880
      %v929 = vmul.f32 %v698, %v882
      %v930 = vmul.f32 %v700, %v884
      %v931 = vmul.f32 %v702, %v886
      %v932 = vmul.f32 %v706, %v890
      %v933 = vmul.f32 %v708, %v892
      %v934 = vmul.f32 %v710, %v894
      %v935 = vmul.f32 %v712, %v896
      %v936 = vmul.f32 %v716, %v900
      %v937 = vmul.f32 %v718, %v902
      %v938 = vmul.f32 %v720, %v904
      %v939 = vmul.f32 %v722, %v906
      %v940 = vmul.f32 %v726, %v910
      %v941 = vmul.f32 %v728, %v912
      %v942 = vpack.c.bf16 %v918, %v916
      %v943 = vpack.c.bf16 %v919, %v917
      %v944 = vpack.c.bf16 %v922, %v920
      %v945 = vpack.c.bf16 %v923, %v921
      %v946 = vpack.c.bf16 %v926, %v924
      %v947 = vpack.c.bf16 %v927, %v925
      %v948 = vpack.c.bf16 %v930, %v928
      %v949 = vpack.c.bf16 %v931, %v929
      %v950 = vpack.c.bf16 %v934, %v932
      %v951 = vpack.c.bf16 %v935, %v933
      %v952 = vpack.c.bf16 %v938, %v936
      %v953 = vpack.c.bf16 %v939, %v937
      %v954 = vpack.c.bf16 %v940, %v940
      %v955 = vpack.c.bf16 %v941, %v941
      %v956 = vld [vmem:[#allocation2] sm:$0xff]
      %v957 = vld [vmem:[#allocation2 + $0x8] sm:$0xff]
      %v958 = vld [vmem:[#allocation2 + $0x10] sm:$0xff]
      %v959 = vld [vmem:[#allocation2 + $0x18] sm:$0xff]
      %v960 = vld [vmem:[#allocation2 + $0x20] sm:$0xff]
      %v961 = vld [vmem:[#allocation2 + $0x28] sm:$0xff]
      %v962 = vld [vmem:[#allocation2 + $0x30] sm:$0xff]
      %v963 = vld [vmem:[#allocation2 + $0x38] sm:$0xff]
      %v964 = vld [vmem:[#allocation2 + $0x40] sm:$0xff]
      %v965 = vld [vmem:[#allocation2 + $0x48] sm:$0xff]
      %v966 = vld [vmem:[#allocation2 + $0x50] sm:$0xff]
      %v967 = vld [vmem:[#allocation2 + $0x58] sm:$0xff]
      %v968 = vld [vmem:[#allocation2 + $0x60] sm:$0xff]
      %v969 = vld [vmem:[#allocation2 + $0x68] sm:$0xff]
      %v970 = vld [vmem:[#allocation2 + $0x70] sm:$0xff]
      %v971 = vld [vmem:[#allocation2 + $0x78] sm:$0xff]
      %v972 = vld [vmem:[#allocation2 + $0x80] sm:$0xff]
      %v973 = vld [vmem:[#allocation2 + $0x88] sm:$0xff]
      %v974 = vld [vmem:[#allocation2 + $0x90] sm:$0xff]
      %v975 = vld [vmem:[#allocation2 + $0x98] sm:$0xff]
      %v976 = vld [vmem:[#allocation2 + $0xa0] sm:$0xff]
      %v977 = vld [vmem:[#allocation2 + $0xa8] sm:$0xff]
      %v978 = vld [vmem:[#allocation2 + $0xb0] sm:$0xff]
      %v979 = vld [vmem:[#allocation2 + $0xb8] sm:$0xff]
      %v980 = vld [vmem:[#allocation2 + $0xc0] sm:$0xf]
      %v981 = vld [vmem:[#allocation2 + $0xc8] sm:$0xf]
      %v982 = vld [vmem:[%s488] sm:$0xff]
      %v983 = vld [vmem:[%s488 + $0x8] sm:$0xff]
      %v984 = vld [vmem:[%s488 + $0x10] sm:$0xff]
      %v985 = vld [vmem:[%s488 + $0x18] sm:$0xff]
      %v986 = vld [vmem:[%s488 + $0x20] sm:$0xff]
      %v987 = vld [vmem:[%s488 + $0x28] sm:$0xff]
      %v988 = vld [vmem:[%s488 + $0x30] sm:$0xff]
      %v989 = vld [vmem:[%s488 + $0x38] sm:$0xff]
      %v990 = vld [vmem:[%s488 + $0x40] sm:$0xff]
      %v991 = vld [vmem:[%s488 + $0x48] sm:$0xff]
      %v992 = vld [vmem:[%s488 + $0x50] sm:$0xff]
      %v993 = vld [vmem:[%s488 + $0x58] sm:$0xff]
      %v994 = vld [vmem:[%s488 + $0x60] sm:$0xff]
      %v995 = vld [vmem:[%s488 + $0x68] sm:$0xff]
      %v996 = vld [vmem:[%s488 + $0x70] sm:$0xff]
      %v997 = vld [vmem:[%s488 + $0x78] sm:$0xff]
      %v998 = vld [vmem:[%s488 + $0x80] sm:$0xff]
      %v999 = vld [vmem:[%s488 + $0x88] sm:$0xff]
      %v1000 = vld [vmem:[%s488 + $0x90] sm:$0xff]
      %v1001 = vld [vmem:[%s488 + $0x98] sm:$0xff]
      %v1002 = vld [vmem:[%s488 + $0xa0] sm:$0xff]
      %v1003 = vld [vmem:[%s488 + $0xa8] sm:$0xff]
      %v1004 = vld [vmem:[%s488 + $0xb0] sm:$0xff]
      %v1005 = vld [vmem:[%s488 + $0xb8] sm:$0xff]
      %v1006 = vld [vmem:[%s488 + $0xc0] sm:$0xff]
      %v1007 = vld [vmem:[%s488 + $0xc8] sm:$0xff]
      %v1008 = vld [vmem:[%s488 + $0xd0] sm:$0xff]
      %v1009 = vld [vmem:[%s488 + $0xd8] sm:$0xff]
      %v1010 = vld [vmem:[%s488 + $0xe0] sm:$0xff]
      %v1011 = vld [vmem:[%s488 + $0xe8] sm:$0xff]
      %v1012 = vld [vmem:[%s488 + $0xf0] sm:$0xff]
      %v1013 = vld [vmem:[%s488 + $0xf8] sm:$0xff]
      %v1046 = vunpack.c.l.b16 %v982
      %v1047 = vunpack.c.h.b16 %v982
      %v1048 = vunpack.c.l.b16 %v983
      %v1049 = vunpack.c.h.b16 %v983
      %v1050 = vunpack.c.l.b16 %v984
      %v1051 = vunpack.c.h.b16 %v984
      %v1052 = vunpack.c.l.b16 %v985
      %v1053 = vunpack.c.h.b16 %v985
      %v1054 = vunpack.c.l.b16 %v986
      %v1055 = vunpack.c.h.b16 %v986
      %v1056 = vunpack.c.l.b16 %v987
      %v1057 = vunpack.c.h.b16 %v987
      %v1058 = vunpack.c.l.b16 %v988
      %v1059 = vunpack.c.h.b16 %v988
      %v1060 = vunpack.c.l.b16 %v989
      %v1061 = vunpack.c.h.b16 %v989
      %v1062 = vunpack.c.l.b16 %v990
      %v1063 = vunpack.c.h.b16 %v990
      %v1064 = vunpack.c.l.b16 %v991
      %v1065 = vunpack.c.h.b16 %v991
      %v1066 = vunpack.c.l.b16 %v992
      %v1067 = vunpack.c.h.b16 %v992
      %v1068 = vunpack.c.l.b16 %v993
      %v1069 = vunpack.c.h.b16 %v993
      %v1070 = vunpack.c.l.b16 %v994
      %v1071 = vunpack.c.h.b16 %v994
      %v1072 = vunpack.c.l.b16 %v995
      %v1073 = vunpack.c.h.b16 %v995
      %v1074 = vunpack.c.l.b16 %v996
      %v1075 = vunpack.c.h.b16 %v996
      %v1076 = vunpack.c.l.b16 %v997
      %v1077 = vunpack.c.h.b16 %v997
      %v1078 = vunpack.c.l.b16 %v998
      %v1079 = vunpack.c.h.b16 %v998
      %v1080 = vunpack.c.l.b16 %v999
      %v1081 = vunpack.c.h.b16 %v999
      %v1082 = vunpack.c.l.b16 %v1000
      %v1083 = vunpack.c.h.b16 %v1000
      %v1084 = vunpack.c.l.b16 %v1001
      %v1085 = vunpack.c.h.b16 %v1001
      %v1086 = vunpack.c.l.b16 %v1002
      %v1087 = vunpack.c.h.b16 %v1002
      %v1088 = vunpack.c.l.b16 %v1003
      %v1089 = vunpack.c.h.b16 %v1003
      %v1090 = vunpack.c.l.b16 %v1004
      %v1091 = vunpack.c.h.b16 %v1004
      %v1092 = vunpack.c.l.b16 %v1005
      %v1093 = vunpack.c.h.b16 %v1005
      %v1094 = vunpack.c.l.b16 %v1006
      %v1095 = vunpack.c.h.b16 %v1006
      %v1096 = vunpack.c.l.b16 %v1007
      %v1097 = vunpack.c.h.b16 %v1007
      %v1098 = vunpack.c.l.b16 %v1008
      %v1099 = vunpack.c.h.b16 %v1008
      %v1100 = vunpack.c.l.b16 %v1009
      %v1101 = vunpack.c.h.b16 %v1009
      %v1102 = vunpack.c.l.b16 %v1010
      %v1103 = vunpack.c.h.b16 %v1010
      %v1104 = vunpack.c.l.b16 %v1011
      %v1105 = vunpack.c.h.b16 %v1011
      %v1106 = vunpack.c.l.b16 %v1012
      %v1107 = vunpack.c.h.b16 %v1012
      %v1108 = vunpack.c.l.b16 %v1013
      %v1109 = vunpack.c.h.b16 %v1013
      %v1110 = vpack.c.b16 %v1048, %v1046
      %v1111 = vpack.c.b16 %v1049, %v1047
      %v1112 = vpack.c.b16 %v1052, %v1050
      %v1113 = vpack.c.b16 %v1053, %v1051
      %v1114 = vpack.c.b16 %v1056, %v1054
      %v1115 = vpack.c.b16 %v1057, %v1055
      %v1116 = vpack.c.b16 %v1060, %v1058
      %v1117 = vpack.c.b16 %v1061, %v1059
      %v1118 = vpack.c.b16 %v1064, %v1062
      %v1119 = vpack.c.b16 %v1065, %v1063
      %v1120 = vpack.c.b16 %v1068, %v1066
      %v1121 = vpack.c.b16 %v1069, %v1067
      %v1122 = vpack.c.b16 %v1072, %v1070
      %v1123 = vpack.c.b16 %v1073, %v1071
      %v1124 = vpack.c.b16 %v1076, %v1074
      %v1125 = vpack.c.b16 %v1077, %v1075
      %v1126 = vpack.c.b16 %v1080, %v1078
      %v1127 = vpack.c.b16 %v1081, %v1079
      %v1128 = vpack.c.b16 %v1084, %v1082
      %v1129 = vpack.c.b16 %v1085, %v1083
      %v1130 = vpack.c.b16 %v1088, %v1086
      %v1131 = vpack.c.b16 %v1089, %v1087
      %v1132 = vpack.c.b16 %v1092, %v1090
      %v1133 = vpack.c.b16 %v1093, %v1091
      %v1134 = vpack.c.b16 %v1096, %v1094
      %v1135 = vpack.c.b16 %v1097, %v1095
      %v1136 = vpack.c.b16 %v1100, %v1098
      %v1137 = vpack.c.b16 %v1101, %v1099
      %v1138 = vpack.c.b16 %v1104, %v1102
      %v1139 = vpack.c.b16 %v1105, %v1103
      %v1140 = vpack.c.b16 %v1108, %v1106
      %v1141 = vpack.c.b16 %v1109, %v1107
      %1174 = vmatprep.subr.bf16.mxu0 %v1111
      %1175 = vmatpush1.bf16.xpose.msra.mxu0 %v1110
      %1176 = vmatprep.subr.bf16.mxu0 %v1113
      %1177 = vmatpush1.bf16.xpose.msra.mxu0 %v1112
      %1178 = vmatprep.subr.bf16.mxu0 %v1115
      %1179 = vmatpush1.bf16.xpose.msra.mxu0 %v1114
      %1180 = vmatprep.subr.bf16.mxu0 %v1117
      %1181 = vmatpush1.bf16.xpose.msra.mxu0 %v1116
      %1182 = vmatprep.subr.bf16.mxu0 %v1119
      %1183 = vmatpush1.bf16.xpose.msra.mxu0 %v1118
      %1184 = vmatprep.subr.bf16.mxu0 %v1121
      %1185 = vmatpush1.bf16.xpose.msra.mxu0 %v1120
      %1186 = vmatprep.subr.bf16.mxu0 %v1123
      %1187 = vmatpush1.bf16.xpose.msra.mxu0 %v1122
      %1188 = vmatprep.subr.bf16.mxu0 %v1125
      %1189 = vmatpush1.bf16.xpose.msra.mxu0 %v1124
      %1190 = vmatprep.subr.bf16.mxu0 %v1127
      %1191 = vmatpush1.bf16.xpose.msra.mxu0 %v1126
      %1192 = vmatprep.subr.bf16.mxu0 %v1129
      %1193 = vmatpush1.bf16.xpose.msra.mxu0 %v1128
      %1194 = vmatprep.subr.bf16.mxu0 %v1131
      %1195 = vmatpush1.bf16.xpose.msra.mxu0 %v1130
      %1196 = vmatprep.subr.bf16.mxu0 %v1133
      %1197 = vmatpush1.bf16.xpose.msra.mxu0 %v1132
      %1198 = vmatprep.subr.bf16.mxu0 %v1135
      %1199 = vmatpush1.bf16.xpose.msra.mxu0 %v1134
      %1200 = vmatprep.subr.bf16.mxu0 %v1137
      %1201 = vmatpush1.bf16.xpose.msra.mxu0 %v1136
      %1202 = vmatprep.subr.bf16.mxu0 %v1139
      %1203 = vmatpush1.bf16.xpose.msra.mxu0 %v1138
      %1204 = vmatprep.subr.bf16.mxu0 %v1141
      %1205 = vmatpush1.bf16.xpose.msra.mxu0 %v1140
      %1206 = vmatprep.mubr.bf16.mxu0 %v943
      %1207 = vmatmul.mubr.bf16.gmra.mrb[0].mxu0 %v942
      %v1208 = vpop.f32.mrb[0].mxu0
      %v1209 = vadd.f32 0.0, %v1208
      %v1210 = vpop.f32.mrb[0].mxu0
      %v1211 = vadd.f32 0.0, %v1210
      %v1212 = vpop.f32.mrb[0].mxu0
      %v1213 = vadd.f32 0.0, %v1212
      %v1214 = vpop.f32.mrb[0].mxu0
      %v1215 = vadd.f32 0.0, %v1214
      %1216 = vmatprep.mubr.bf16.mxu0 %v945
      %1217 = vmatmul.mubr.bf16.gmra.mrb[0].mxu0 %v944
      %v1218 = vpop.f32.mrb[0].mxu0
      %v1219 = vadd.f32 0.0, %v1218
      %v1220 = vpop.f32.mrb[0].mxu0
      %v1221 = vadd.f32 0.0, %v1220
      %v1222 = vpop.f32.mrb[0].mxu0
      %v1223 = vadd.f32 0.0, %v1222
      %v1224 = vpop.f32.mrb[0].mxu0
      %v1225 = vadd.f32 0.0, %v1224
      %1226 = vmatprep.mubr.bf16.mxu0 %v947
      %1227 = vmatmul.mubr.bf16.gmra.mrb[0].mxu0 %v946
      %v1228 = vpop.f32.mrb[0].mxu0
      %v1229 = vadd.f32 0.0, %v1228
      %v1230 = vpop.f32.mrb[0].mxu0
      %v1231 = vadd.f32 0.0, %v1230
      %v1232 = vpop.f32.mrb[0].mxu0
      %v1233 = vadd.f32 0.0, %v1232
      %v1234 = vpop.f32.mrb[0].mxu0
      %v1235 = vadd.f32 0.0, %v1234
      %1236 = vmatprep.mubr.bf16.mxu0 %v949
      %1237 = vmatmul.mubr.bf16.gmra.mrb[0].mxu0 %v948
      %v1238 = vpop.f32.mrb[0].mxu0
      %v1239 = vadd.f32 0.0, %v1238
      %v1240 = vpop.f32.mrb[0].mxu0
      %v1241 = vadd.f32 0.0, %v1240
      %v1242 = vpop.f32.mrb[0].mxu0
      %v1243 = vadd.f32 0.0, %v1242
      %v1244 = vpop.f32.mrb[0].mxu0
      %v1245 = vadd.f32 0.0, %v1244
      %1246 = vmatprep.mubr.bf16.mxu0 %v951
      %1247 = vmatmul.mubr.bf16.gmra.mrb[0].mxu0 %v950
      %v1248 = vpop.f32.mrb[0].mxu0
      %v1249 = vadd.f32 0.0, %v1248
      %v1250 = vpop.f32.mrb[0].mxu0
      %v1251 = vadd.f32 0.0, %v1250
      %v1252 = vpop.f32.mrb[0].mxu0
      %v1253 = vadd.f32 0.0, %v1252
      %v1254 = vpop.f32.mrb[0].mxu0
      %v1255 = vadd.f32 0.0, %v1254
      %1256 = vmatprep.mubr.bf16.mxu0 %v953
      %1257 = vmatmul.mubr.bf16.gmra.mrb[0].mxu0 %v952
      %v1258 = vpop.f32.mrb[0].mxu0
      %v1259 = vadd.f32 0.0, %v1258
      %v1260 = vpop.f32.mrb[0].mxu0
      %v1261 = vadd.f32 0.0, %v1260
      %v1262 = vpop.f32.mrb[0].mxu0
      %v1263 = vadd.f32 0.0, %v1262
      %v1264 = vpop.f32.mrb[0].mxu0
      %v1265 = vadd.f32 0.0, %v1264
      %1266 = vmatprep.mubr.bf16.mxu0 %v955
      %1267 = vmatmul.mubr.bf16.gmra.mrb[0].mxu0 %v954
      %v1268 = vpop.f32.mrb[0].mxu0
      %v1269 = vadd.f32 0.0, %v1268
      %v1270 = vpop.f32.mrb[0].mxu0
      %v1271 = vadd.f32 0.0, %v1270
      %v1272 = vpop.f32.mrb[0].mxu0
      %v1273 = vpop.f32.mrb[0].mxu0
      %1274 = vdwg.mxu0
      %v1275 = vadd.f32 %v956, %v1209
      %v1276 = vadd.f32 %v957, %v1211
      %v1277 = vadd.f32 %v958, %v1213
      %v1278 = vadd.f32 %v959, %v1215
      %v1279 = vadd.f32 %v960, %v1219
      %v1280 = vadd.f32 %v961, %v1221
      %v1281 = vadd.f32 %v962, %v1223
      %v1282 = vadd.f32 %v963, %v1225
      %v1283 = vadd.f32 %v964, %v1229
      %v1284 = vadd.f32 %v965, %v1231
      %v1285 = vadd.f32 %v966, %v1233
      %v1286 = vadd.f32 %v967, %v1235
      %v1287 = vadd.f32 %v968, %v1239
      %v1288 = vadd.f32 %v969, %v1241
      %v1289 = vadd.f32 %v970, %v1243
      %v1290 = vadd.f32 %v971, %v1245
      %v1291 = vadd.f32 %v972, %v1249
      %v1292 = vadd.f32 %v973, %v1251
      %v1293 = vadd.f32 %v974, %v1253
      %v1294 = vadd.f32 %v975, %v1255
      %v1295 = vadd.f32 %v976, %v1259
      %v1296 = vadd.f32 %v977, %v1261
      %v1297 = vadd.f32 %v978, %v1263
      %v1298 = vadd.f32 %v979, %v1265
      %v1299 = vadd.f32 %v980, %v1269
      %v1300 = vadd.f32 %v981, %v1271
      %1301 = vst [vmem:[#allocation2] sm:$0xff] %v1275
      %1302 = vst [vmem:[#allocation2 + $0x8] sm:$0xff] %v1276
      %1303 = vst [vmem:[#allocation2 + $0x10] sm:$0xff] %v1277
      %1304 = vst [vmem:[#allocation2 + $0x18] sm:$0xff] %v1278
      %1305 = vst [vmem:[#allocation2 + $0x20] sm:$0xff] %v1279
      %1306 = vst [vmem:[#allocation2 + $0x28] sm:$0xff] %v1280
      %1307 = vst [vmem:[#allocation2 + $0x30] sm:$0xff] %v1281
      %1308 = vst [vmem:[#allocation2 + $0x38] sm:$0xff] %v1282
      %1309 = vst [vmem:[#allocation2 + $0x40] sm:$0xff] %v1283
      %1310 = vst [vmem:[#allocation2 + $0x48] sm:$0xff] %v1284
      %1311 = vst [vmem:[#allocation2 + $0x50] sm:$0xff] %v1285
      %1312 = vst [vmem:[#allocation2 + $0x58] sm:$0xff] %v1286
      %1313 = vst [vmem:[#allocation2 + $0x60] sm:$0xff] %v1287
      %1314 = vst [vmem:[#allocation2 + $0x68] sm:$0xff] %v1288
      %1315 = vst [vmem:[#allocation2 + $0x70] sm:$0xff] %v1289
      %1316 = vst [vmem:[#allocation2 + $0x78] sm:$0xff] %v1290
      %1317 = vst [vmem:[#allocation2 + $0x80] sm:$0xff] %v1291
      %1318 = vst [vmem:[#allocation2 + $0x88] sm:$0xff] %v1292
      %1319 = vst [vmem:[#allocation2 + $0x90] sm:$0xff] %v1293
      %1320 = vst [vmem:[#allocation2 + $0x98] sm:$0xff] %v1294
      %1321 = vst [vmem:[#allocation2 + $0xa0] sm:$0xff] %v1295
      %1322 = vst [vmem:[#allocation2 + $0xa8] sm:$0xff] %v1296
      %1323 = vst [vmem:[#allocation2 + $0xb0] sm:$0xff] %v1297
      %1324 = vst [vmem:[#allocation2 + $0xb8] sm:$0xff] %v1298
      %1325 = vst [vmem:[#allocation2 + $0xc0] sm:$0xf] %v1299
      %1326 = vst [vmem:[#allocation2 + $0xc8] sm:$0xf] %v1300
      %v1327 = vld [vmem:[#allocation3] sm:$0xff]
      %v1328 = vld [vmem:[#allocation3 + $0x8] sm:$0xff]
      %v1329 = vld [vmem:[#allocation3 + $0x10] sm:$0xff]
      %v1330 = vld [vmem:[#allocation3 + $0x18] sm:$0xff]
      %v1331 = vld [vmem:[#allocation3 + $0x20] sm:$0xff]
      %v1332 = vld [vmem:[#allocation3 + $0x28] sm:$0xff]
      %v1333 = vld [vmem:[#allocation3 + $0x30] sm:$0xff]
      %v1334 = vld [vmem:[#allocation3 + $0x38] sm:$0xff]
      %v1335 = vld [vmem:[#allocation3 + $0x40] sm:$0xff]
      %v1336 = vld [vmem:[#allocation3 + $0x48] sm:$0xff]
      %v1337 = vld [vmem:[#allocation3 + $0x50] sm:$0xff]
      %v1338 = vld [vmem:[#allocation3 + $0x58] sm:$0xff]
      %v1339 = vld [vmem:[#allocation3 + $0x60] sm:$0xf]
      %v1340 = vadd.f32 %v916, %v917
      %1341 = vadd.xlane.f32.xlu0 %v1340
      %v1342 = vpop.xlane.xlu0 %1341
      %v1343 = vadd.f32 %v918, %v919
      %1344 = vadd.xlane.f32.xlu0 %v1343
      %v1345 = vpop.xlane.xlu0 %1344
      %v1346 = vadd.f32 %v920, %v921
      %1347 = vadd.xlane.f32.xlu0 %v1346
      %v1348 = vpop.xlane.xlu0 %1347
      %v1349 = vadd.f32 %v922, %v923
      %1350 = vadd.xlane.f32.xlu0 %v1349
      %v1351 = vpop.xlane.xlu0 %1350
      %v1352 = vadd.f32 %v924, %v925
      %1353 = vadd.xlane.f32.xlu0 %v1352
      %v1354 = vpop.xlane.xlu0 %1353
      %v1355 = vadd.f32 %v926, %v927
      %1356 = vadd.xlane.f32.xlu0 %v1355
      %v1357 = vpop.xlane.xlu0 %1356
      %v1358 = vadd.f32 %v928, %v929
      %1359 = vadd.xlane.f32.xlu0 %v1358
      %v1360 = vpop.xlane.xlu0 %1359
      %v1361 = vadd.f32 %v930, %v931
      %1362 = vadd.xlane.f32.xlu0 %v1361
      %v1363 = vpop.xlane.xlu0 %1362
      %v1364 = vadd.f32 %v932, %v933
      %1365 = vadd.xlane.f32.xlu0 %v1364
      %v1366 = vpop.xlane.xlu0 %1365
      %v1367 = vadd.f32 %v934, %v935
      %1368 = vadd.xlane.f32.xlu0 %v1367
      %v1369 = vpop.xlane.xlu0 %1368
      %v1370 = vadd.f32 %v936, %v937
      %1371 = vadd.xlane.f32.xlu0 %v1370
      %v1372 = vpop.xlane.xlu0 %1371
      %v1373 = vadd.f32 %v938, %v939
      %1374 = vadd.xlane.f32.xlu0 %v1373
      %v1375 = vpop.xlane.xlu0 %1374
      %vm1376 = vcmask 1043456
      %v1377 = vsel %vm1376, %v940, 0.0
      %v1378 = vsel %vm1376, %v941, 0.0
      %v1379 = vadd.f32 %v1377, %v1378
      %1380 = vadd.xlane.f32.xlu0 %v1379
      %v1381 = vpop.xlane.xlu0 %1380
      %v1382 = vadd.f32 %v1327, %v1342
      %v1383 = vadd.f32 %v1328, %v1345
      %v1384 = vadd.f32 %v1329, %v1348
      %v1385 = vadd.f32 %v1330, %v1351
      %v1386 = vadd.f32 %v1331, %v1354
      %v1387 = vadd.f32 %v1332, %v1357
      %v1388 = vadd.f32 %v1333, %v1360
      %v1389 = vadd.f32 %v1334, %v1363
      %v1390 = vadd.f32 %v1335, %v1366
      %v1391 = vadd.f32 %v1336, %v1369
      %v1392 = vadd.f32 %v1337, %v1372
      %v1393 = vadd.f32 %v1338, %v1375
      %v1394 = vadd.f32 %v1339, %v1381
      %vm1395 = vcmask 7168
      %1396 = vst.msk [vmem:[#allocation3] sm:$0xff] %vm1395, %v1382
      %1397 = vst.msk [vmem:[#allocation3 + $0x8] sm:$0xff] %vm1395, %v1383
      %1398 = vst.msk [vmem:[#allocation3 + $0x10] sm:$0xff] %vm1395, %v1384
      %1399 = vst.msk [vmem:[#allocation3 + $0x18] sm:$0xff] %vm1395, %v1385
      %1400 = vst.msk [vmem:[#allocation3 + $0x20] sm:$0xff] %vm1395, %v1386
      %1401 = vst.msk [vmem:[#allocation3 + $0x28] sm:$0xff] %vm1395, %v1387
      %1402 = vst.msk [vmem:[#allocation3 + $0x30] sm:$0xff] %vm1395, %v1388
      %1403 = vst.msk [vmem:[#allocation3 + $0x38] sm:$0xff] %vm1395, %v1389
      %1404 = vst.msk [vmem:[#allocation3 + $0x40] sm:$0xff] %vm1395, %v1390
      %1405 = vst.msk [vmem:[#allocation3 + $0x48] sm:$0xff] %vm1395, %v1391
      %1406 = vst.msk [vmem:[#allocation3 + $0x50] sm:$0xff] %vm1395, %v1392
      %1407 = vst.msk [vmem:[#allocation3 + $0x58] sm:$0xff] %vm1395, %v1393
      %vm1408 = vcmask 3072
      %1409 = vst.msk [vmem:[#allocation3 + $0x60] sm:$0xf] %vm1408, %v1394
      // Predicated region
      $region65: #{metric_model_forward.3} parent=59 // pred_check
        %p1410 = pneg %p501
      $region66: #{metric_model_forward.3} parent=59 // pred_check_branch
        %1412 = sbr.rel (%p1410) target = $region68
      $region67: #{metric_model_forward.3} parent=59 // pred_region
        %v1413 = vld [vmem:[#allocation2] sm:$0xff]
        %v1414 = vld [vmem:[#allocation2 + $0x8] sm:$0xff]
        %v1415 = vld [vmem:[#allocation2 + $0x10] sm:$0xff]
        %v1416 = vld [vmem:[#allocation2 + $0x18] sm:$0xff]
        %v1417 = vld [vmem:[#allocation2 + $0x20] sm:$0xff]
        %v1418 = vld [vmem:[#allocation2 + $0x28] sm:$0xff]
        %v1419 = vld [vmem:[#allocation2 + $0x30] sm:$0xff]
        %v1420 = vld [vmem:[#allocation2 + $0x38] sm:$0xff]
        %v1421 = vld [vmem:[#allocation2 + $0x40] sm:$0xff]
        %v1422 = vld [vmem:[#allocation2 + $0x48] sm:$0xff]
        %v1423 = vld [vmem:[#allocation2 + $0x50] sm:$0xff]
        %v1424 = vld [vmem:[#allocation2 + $0x58] sm:$0xff]
        %v1425 = vld [vmem:[#allocation2 + $0x60] sm:$0xff]
        %v1426 = vld [vmem:[#allocation2 + $0x68] sm:$0xff]
        %v1427 = vld [vmem:[#allocation2 + $0x70] sm:$0xff]
        %v1428 = vld [vmem:[#allocation2 + $0x78] sm:$0xff]
        %v1429 = vld [vmem:[#allocation2 + $0x80] sm:$0xff]
        %v1430 = vld [vmem:[#allocation2 + $0x88] sm:$0xff]
        %v1431 = vld [vmem:[#allocation2 + $0x90] sm:$0xff]
        %v1432 = vld [vmem:[#allocation2 + $0x98] sm:$0xff]
        %v1433 = vld [vmem:[#allocation2 + $0xa0] sm:$0xff]
        %v1434 = vld [vmem:[#allocation2 + $0xa8] sm:$0xff]
        %v1435 = vld [vmem:[#allocation2 + $0xb0] sm:$0xff]
        %v1436 = vld [vmem:[#allocation2 + $0xb8] sm:$0xff]
        %v1437 = vld [vmem:[#allocation2 + $0xc0] sm:$0xf]
        %v1438 = vld [vmem:[#allocation2 + $0xc8] sm:$0xf]
        %v1439 = vld [vmem:[#allocation3] sm:$0xff]
        %v1440 = vld [vmem:[#allocation3 + $0x8] sm:$0xff]
        %v1441 = vld [vmem:[#allocation3 + $0x10] sm:$0xff]
        %v1442 = vld [vmem:[#allocation3 + $0x18] sm:$0xff]
        %v1443 = vld [vmem:[#allocation3 + $0x20] sm:$0xff]
        %v1444 = vld [vmem:[#allocation3 + $0x28] sm:$0xff]
        %v1445 = vld [vmem:[#allocation3 + $0x30] sm:$0xff]
        %v1446 = vld [vmem:[#allocation3 + $0x38] sm:$0xff]
        %v1447 = vld [vmem:[#allocation3 + $0x40] sm:$0xff]
        %v1448 = vld [vmem:[#allocation3 + $0x48] sm:$0xff]
        %v1449 = vld [vmem:[#allocation3 + $0x50] sm:$0xff]
        %v1450 = vld [vmem:[#allocation3 + $0x58] sm:$0xff]
        %v1451 = vld [vmem:[#allocation3 + $0x60] sm:$0xf]
        %vm1452 = vcmp.gt.f32.partialorder %v1439, 0.0
        %vm1453 = vcmp.gt.f32.partialorder %v1440, 0.0
        %vm1454 = vcmp.gt.f32.partialorder %v1441, 0.0
        %vm1455 = vcmp.gt.f32.partialorder %v1442, 0.0
        %vm1456 = vcmp.gt.f32.partialorder %v1443, 0.0
        %vm1457 = vcmp.gt.f32.partialorder %v1444, 0.0
        %vm1458 = vcmp.gt.f32.partialorder %v1445, 0.0
        %vm1459 = vcmp.gt.f32.partialorder %v1446, 0.0
        %vm1460 = vcmp.gt.f32.partialorder %v1447, 0.0
        %vm1461 = vcmp.gt.f32.partialorder %v1448, 0.0
        %vm1462 = vcmp.gt.f32.partialorder %v1449, 0.0
        %vm1463 = vcmp.gt.f32.partialorder %v1450, 0.0
        %vm1464 = vcmp.gt.f32.partialorder %v1451, 0.0
        %v1465 = vrcp.pop %v1439
        %v1466 = vrcp.pop %v1440
        %v1467 = vrcp.pop %v1441
        %v1468 = vrcp.pop %v1442
        %v1469 = vrcp.pop %v1443
        %v1470 = vrcp.pop %v1444
        %v1471 = vrcp.pop %v1445
        %v1472 = vrcp.pop %v1446
        %v1473 = vrcp.pop %v1447
        %v1474 = vrcp.pop %v1448
        %v1475 = vrcp.pop %v1449
        %v1476 = vrcp.pop %v1450
        %v1477 = vrcp.pop %v1451
        %v1478 = vsel %vm1452, %v1465, 0.0
        %v1479 = vsel %vm1453, %v1466, 0.0
        %v1480 = vsel %vm1454, %v1467, 0.0
        %v1481 = vsel %vm1455, %v1468, 0.0
        %v1482 = vsel %vm1456, %v1469, 0.0
        %v1483 = vsel %vm1457, %v1470, 0.0
        %v1484 = vsel %vm1458, %v1471, 0.0
        %v1485 = vsel %vm1459, %v1472, 0.0
        %v1486 = vsel %vm1460, %v1473, 0.0
        %v1487 = vsel %vm1461, %v1474, 0.0
        %v1488 = vsel %vm1462, %v1475, 0.0
        %v1489 = vsel %vm1463, %v1476, 0.0
        %v1490 = vsel %vm1464, %v1477, 0.0
        %1492 = vset.pattern.permute.xlu0 0
        %1493 = vperm.xlu0 %1492, %v1478
        %v1494 = vpop.permute.xlu0 %1493
        %1497 = vset.pattern.permute.xlu0 0
        %1498 = vperm.xlu0 %1497, %v1479
        %v1499 = vpop.permute.xlu0 %1498
        %1502 = vset.pattern.permute.xlu0 0
        %1503 = vperm.xlu0 %1502, %v1480
        %v1504 = vpop.permute.xlu0 %1503
        %1507 = vset.pattern.permute.xlu0 0
        %1508 = vperm.xlu0 %1507, %v1481
        %v1509 = vpop.permute.xlu0 %1508
        %1512 = vset.pattern.permute.xlu0 0
        %1513 = vperm.xlu0 %1512, %v1482
        %v1514 = vpop.permute.xlu0 %1513
        %1517 = vset.pattern.permute.xlu0 0
        %1518 = vperm.xlu0 %1517, %v1483
        %v1519 = vpop.permute.xlu0 %1518
        %1522 = vset.pattern.permute.xlu0 0
        %1523 = vperm.xlu0 %1522, %v1484
        %v1524 = vpop.permute.xlu0 %1523
        %1527 = vset.pattern.permute.xlu0 0
        %1528 = vperm.xlu0 %1527, %v1485
        %v1529 = vpop.permute.xlu0 %1528
        %1532 = vset.pattern.permute.xlu0 0
        %1533 = vperm.xlu0 %1532, %v1486
        %v1534 = vpop.permute.xlu0 %1533
        %1537 = vset.pattern.permute.xlu0 0
        %1538 = vperm.xlu0 %1537, %v1487
        %v1539 = vpop.permute.xlu0 %1538
        %1542 = vset.pattern.permute.xlu0 0
        %1543 = vperm.xlu0 %1542, %v1488
        %v1544 = vpop.permute.xlu0 %1543
        %1547 = vset.pattern.permute.xlu0 0
        %1548 = vperm.xlu0 %1547, %v1489
        %v1549 = vpop.permute.xlu0 %1548
        %1552 = vset.pattern.permute.xlu0 0
        %1553 = vperm.xlu0 %1552, %v1490
        %v1554 = vpop.permute.xlu0 %1553
        %v1556 = vmul.f32 %v1413, %v1494
        %v1557 = vmul.f32 %v1414, %v1494
        %v1558 = vmul.f32 %v1415, %v1499
        %v1559 = vmul.f32 %v1416, %v1499
        %v1560 = vmul.f32 %v1417, %v1504
        %v1561 = vmul.f32 %v1418, %v1504
        %v1562 = vmul.f32 %v1419, %v1509
        %v1563 = vmul.f32 %v1420, %v1509
        %v1564 = vmul.f32 %v1421, %v1514
        %v1565 = vmul.f32 %v1422, %v1514
        %v1566 = vmul.f32 %v1423, %v1519
        %v1567 = vmul.f32 %v1424, %v1519
        %v1568 = vmul.f32 %v1425, %v1524
        %v1569 = vmul.f32 %v1426, %v1524
        %v1570 = vmul.f32 %v1427, %v1529
        %v1571 = vmul.f32 %v1428, %v1529
        %v1572 = vmul.f32 %v1429, %v1534
        %v1573 = vmul.f32 %v1430, %v1534
        %v1574 = vmul.f32 %v1431, %v1539
        %v1575 = vmul.f32 %v1432, %v1539
        %v1576 = vmul.f32 %v1433, %v1544
        %v1577 = vmul.f32 %v1434, %v1544
        %v1578 = vmul.f32 %v1435, %v1549
        %v1579 = vmul.f32 %v1436, %v1549
        %v1580 = vmul.f32 %v1437, %v1554
        %v1581 = vmul.f32 %v1438, %v1554
        %v1582 = vpack.c.bf16 %v1558, %v1556
        %v1583 = vpack.c.bf16 %v1559, %v1557
        %v1584 = vpack.c.bf16 %v1562, %v1560
        %v1585 = vpack.c.bf16 %v1563, %v1561
        %v1586 = vpack.c.bf16 %v1566, %v1564
        %v1587 = vpack.c.bf16 %v1567, %v1565
        %v1588 = vpack.c.bf16 %v1570, %v1568
        %v1589 = vpack.c.bf16 %v1571, %v1569
        %v1590 = vpack.c.bf16 %v1574, %v1572
        %v1591 = vpack.c.bf16 %v1575, %v1573
        %v1592 = vpack.c.bf16 %v1578, %v1576
        %v1593 = vpack.c.bf16 %v1579, %v1577
        %v1594 = vpack.c.bf16 %v1580, %v1580
        %v1595 = vpack.c.bf16 %v1581, %v1581
        %v1596 = vld [vmem:[%s5] sm:$0xf]
        %v1597 = vld [vmem:[%s5 + $0x4] sm:$0xf]
        %v1598 = vld [vmem:[%s5 + $0x8] sm:$0xf]
        %v1599 = vld [vmem:[%s5 + $0xc] sm:$0xf]
        %v1600 = vld [vmem:[%s5 + $0x10] sm:$0xf]
        %v1601 = vld [vmem:[%s5 + $0x14] sm:$0xf]
        %v1602 = vld [vmem:[%s5 + $0x18] sm:$0xf]
        %v1603 = vld [vmem:[%s5 + $0x1c] sm:$0xf]
        %v1604 = vld [vmem:[%s5 + $0x20] sm:$0xf]
        %v1605 = vld [vmem:[%s5 + $0x24] sm:$0xf]
        %v1606 = vld [vmem:[%s5 + $0x28] sm:$0xf]
        %v1607 = vld [vmem:[%s5 + $0x2c] sm:$0xf]
        %v1608 = vld [vmem:[%s5 + $0x30] sm:$0xf]
        %v1609 = vld [vmem:[%s5 + $0x34] sm:$0xf]
        %v1610 = vld [vmem:[%s5 + $0x38] sm:$0xf]
        %v1611 = vld [vmem:[%s5 + $0x3c] sm:$0xf]
        %v1612 = vld [vmem:[%s5 + $0x40] sm:$0xf]
        %v1613 = vld [vmem:[%s5 + $0x44] sm:$0xf]
        %v1614 = vld [vmem:[%s5 + $0x48] sm:$0xf]
        %v1615 = vld [vmem:[%s5 + $0x4c] sm:$0xf]
        %v1616 = vld [vmem:[%s5 + $0x50] sm:$0xf]
        %v1617 = vld [vmem:[%s5 + $0x54] sm:$0xf]
        %v1618 = vld [vmem:[%s5 + $0x58] sm:$0xf]
        %v1619 = vld [vmem:[%s5 + $0x5c] sm:$0xf]
        %v1620 = vld [vmem:[%s5 + $0x60] sm:$0xf]
        %v1621 = vld [vmem:[%s5 + $0x64] sm:$0xf]
        %v1622 = vld [vmem:[%s5 + $0x68] sm:$0xf]
        %v1623 = vld [vmem:[%s5 + $0x6c] sm:$0xf]
        %v1624 = vld [vmem:[%s5 + $0x70] sm:$0xf]
        %v1625 = vld [vmem:[%s5 + $0x74] sm:$0xf]
        %v1626 = vld [vmem:[%s5 + $0x78] sm:$0xf]
        %v1627 = vld [vmem:[%s5 + $0x7c] sm:$0xf]
        %v1628 = vld [vmem:[%s6] sm:$0x1]
        %v1630 = vlaneseq
        %v1631 = vshrl.u32 %v1630, 7
        %v1632 = vsub.s32 0, %v1631
        %v1633 = vrot.slane %v1628, %v1632
        %v1667 = vunpack.c.l.b16 %v1596
        %v1668 = vunpack.c.l.b16 %v1597
        %v1669 = vunpack.c.l.b16 %v1598
        %v1670 = vunpack.c.l.b16 %v1599
        %v1671 = vunpack.c.l.b16 %v1600
        %v1672 = vunpack.c.l.b16 %v1601
        %v1673 = vunpack.c.l.b16 %v1602
        %v1674 = vunpack.c.l.b16 %v1603
        %v1675 = vunpack.c.l.b16 %v1604
        %v1676 = vunpack.c.l.b16 %v1605
        %v1677 = vunpack.c.l.b16 %v1606
        %v1678 = vunpack.c.l.b16 %v1607
        %v1679 = vunpack.c.l.b16 %v1608
        %v1680 = vunpack.c.l.b16 %v1609
        %v1681 = vunpack.c.l.b16 %v1610
        %v1682 = vunpack.c.l.b16 %v1611
        %v1683 = vunpack.c.l.b16 %v1612
        %v1684 = vunpack.c.l.b16 %v1613
        %v1685 = vunpack.c.l.b16 %v1614
        %v1686 = vunpack.c.l.b16 %v1615
        %v1687 = vunpack.c.l.b16 %v1616
        %v1688 = vunpack.c.l.b16 %v1617
        %v1689 = vunpack.c.l.b16 %v1618
        %v1690 = vunpack.c.l.b16 %v1619
        %v1691 = vunpack.c.l.b16 %v1620
        %v1692 = vunpack.c.l.b16 %v1621
        %v1693 = vunpack.c.l.b16 %v1622
        %v1694 = vunpack.c.l.b16 %v1623
        %v1695 = vunpack.c.l.b16 %v1624
        %v1696 = vunpack.c.l.b16 %v1625
        %v1697 = vunpack.c.l.b16 %v1626
        %v1698 = vunpack.c.l.b16 %v1627
        %v1699 = vpack.c.b16 %v1668, %v1667
        %v1700 = vpack.c.b16 %v1670, %v1669
        %v1701 = vpack.c.b16 %v1672, %v1671
        %v1702 = vpack.c.b16 %v1674, %v1673
        %v1703 = vpack.c.b16 %v1676, %v1675
        %v1704 = vpack.c.b16 %v1678, %v1677
        %v1705 = vpack.c.b16 %v1680, %v1679
        %v1706 = vpack.c.b16 %v1682, %v1681
        %v1707 = vpack.c.b16 %v1684, %v1683
        %v1708 = vpack.c.b16 %v1686, %v1685
        %v1709 = vpack.c.b16 %v1688, %v1687
        %v1710 = vpack.c.b16 %v1690, %v1689
        %v1711 = vpack.c.b16 %v1692, %v1691
        %v1712 = vpack.c.b16 %v1694, %v1693
        %v1713 = vpack.c.b16 %v1696, %v1695
        %v1714 = vpack.c.b16 %v1698, %v1697
        %1731 = vmatprep.subr.bf16.mxu0 0
        %1732 = vmatpush1.bf16.msra.mxu0 %v1699
        %1733 = vmatprep.subr.bf16.mxu0 0
        %1734 = vmatpush1.bf16.msra.mxu0 %v1700
        %1735 = vmatprep.subr.bf16.mxu0 0
        %1736 = vmatpush1.bf16.msra.mxu0 %v1701
        %1737 = vmatprep.subr.bf16.mxu0 0
        %1738 = vmatpush1.bf16.msra.mxu0 %v1702
        %1739 = vmatprep.subr.bf16.mxu0 0
        %1740 = vmatpush1.bf16.msra.mxu0 %v1703
        %1741 = vmatprep.subr.bf16.mxu0 0
        %1742 = vmatpush1.bf16.msra.mxu0 %v1704
        %1743 = vmatprep.subr.bf16.mxu0 0
        %1744 = vmatpush1.bf16.msra.mxu0 %v1705
        %1745 = vmatprep.subr.bf16.mxu0 0
        %1746 = vmatpush1.bf16.msra.mxu0 %v1706
        %1747 = vmatprep.subr.bf16.mxu0 0
        %1748 = vmatpush1.bf16.msra.mxu0 %v1707
        %1749 = vmatprep.subr.bf16.mxu0 0
        %1750 = vmatpush1.bf16.msra.mxu0 %v1708
        %1751 = vmatprep.subr.bf16.mxu0 0
        %1752 = vmatpush1.bf16.msra.mxu0 %v1709
        %1753 = vmatprep.subr.bf16.mxu0 0
        %1754 = vmatpush1.bf16.msra.mxu0 %v1710
        %1755 = vmatprep.subr.bf16.mxu0 0
        %1756 = vmatpush1.bf16.msra.mxu0 %v1711
        %1757 = vmatprep.subr.bf16.mxu0 0
        %1758 = vmatpush1.bf16.msra.mxu0 %v1712
        %1759 = vmatprep.subr.bf16.mxu0 0
        %1760 = vmatpush1.bf16.msra.mxu0 %v1713
        %1761 = vmatprep.subr.bf16.mxu0 0
        %1762 = vmatpush1.bf16.msra.mxu0 %v1714
        %1763 = vmatprep.mubr.bf16.mxu0 %v1583
        %1764 = vmatmul.mubr.bf16.gmra.mrb[0].mxu0 %v1582
        %v1765 = vpop.f32.mrb[0].mxu0
        %v1766 = vadd.f32 %v1633, %v1765
        %v1767 = vpop.f32.mrb[0].mxu0
        %v1768 = vpop.f32.mrb[0].mxu0
        %v1769 = vadd.f32 %v1633, %v1768
        %v1770 = vpop.f32.mrb[0].mxu0
        %1771 = vmatprep.mubr.bf16.mxu0 %v1585
        %1772 = vmatmul.mubr.bf16.gmra.mrb[0].mxu0 %v1584
        %v1773 = vpop.f32.mrb[0].mxu0
        %v1774 = vadd.f32 %v1633, %v1773
        %v1775 = vpop.f32.mrb[0].mxu0
        %v1776 = vpop.f32.mrb[0].mxu0
        %v1777 = vadd.f32 %v1633, %v1776
        %v1778 = vpop.f32.mrb[0].mxu0
        %1779 = vmatprep.mubr.bf16.mxu0 %v1587
        %1780 = vmatmul.mubr.bf16.gmra.mrb[0].mxu0 %v1586
        %v1781 = vpop.f32.mrb[0].mxu0
        %v1782 = vadd.f32 %v1633, %v1781
        %v1783 = vpop.f32.mrb[0].mxu0
        %v1784 = vpop.f32.mrb[0].mxu0
        %v1785 = vadd.f32 %v1633, %v1784
        %v1786 = vpop.f32.mrb[0].mxu0
        %1787 = vmatprep.mubr.bf16.mxu0 %v1589
        %1788 = vmatmul.mubr.bf16.gmra.mrb[0].mxu0 %v1588
        %v1789 = vpop.f32.mrb[0].mxu0
        %v1790 = vadd.f32 %v1633, %v1789
        %v1791 = vpop.f32.mrb[0].mxu0
        %v1792 = vpop.f32.mrb[0].mxu0
        %v1793 = vadd.f32 %v1633, %v1792
        %v1794 = vpop.f32.mrb[0].mxu0
        %1795 = vmatprep.mubr.bf16.mxu0 %v1591
        %1796 = vmatmul.mubr.bf16.gmra.mrb[0].mxu0 %v1590
        %v1797 = vpop.f32.mrb[0].mxu0
        %v1798 = vadd.f32 %v1633, %v1797
        %v1799 = vpop.f32.mrb[0].mxu0
        %v1800 = vpop.f32.mrb[0].mxu0
        %v1801 = vadd.f32 %v1633, %v1800
        %v1802 = vpop.f32.mrb[0].mxu0
        %1803 = vmatprep.mubr.bf16.mxu0 %v1593
        %1804 = vmatmul.mubr.bf16.gmra.mrb[0].mxu0 %v1592
        %v1805 = vpop.f32.mrb[0].mxu0
        %v1806 = vadd.f32 %v1633, %v1805
        %v1807 = vpop.f32.mrb[0].mxu0
        %v1808 = vpop.f32.mrb[0].mxu0
        %v1809 = vadd.f32 %v1633, %v1808
        %v1810 = vpop.f32.mrb[0].mxu0
        %1811 = vmatprep.mubr.bf16.mxu0 %v1595
        %1812 = vmatmul.mubr.bf16.gmra.mrb[0].mxu0 %v1594
        %v1813 = vpop.f32.mrb[0].mxu0
        %v1814 = vadd.f32 %v1633, %v1813
        %v1815 = vpop.f32.mrb[0].mxu0
        %v1816 = vpop.f32.mrb[0].mxu0
        %v1817 = vpop.f32.mrb[0].mxu0
        %1818 = vdwg.mxu0
        %v1819 = vmax.f32 %v1766, 0.0
        %v1820 = vmax.f32 %v1769, 0.0
        %v1821 = vmax.f32 %v1774, 0.0
        %v1822 = vmax.f32 %v1777, 0.0
        %v1823 = vmax.f32 %v1782, 0.0
        %v1824 = vmax.f32 %v1785, 0.0
        %v1825 = vmax.f32 %v1790, 0.0
        %v1826 = vmax.f32 %v1793, 0.0
        %v1827 = vmax.f32 %v1798, 0.0
        %v1828 = vmax.f32 %v1801, 0.0
        %v1829 = vmax.f32 %v1806, 0.0
        %v1830 = vmax.f32 %v1809, 0.0
        %v1831 = vmax.f32 %v1814, 0.0
        %v1832 = vpack.c.bf16 %v1820, %v1819
        %v1833 = vpack.c.bf16 %v1822, %v1821
        %v1834 = vpack.c.bf16 %v1824, %v1823
        %v1835 = vpack.c.bf16 %v1826, %v1825
        %v1836 = vpack.c.bf16 %v1828, %v1827
        %v1837 = vpack.c.bf16 %v1830, %v1829
        %v1838 = vpack.c.bf16 %v1831, %v1831
        %v1839 = vld [vmem:[%s7] sm:$0xf]
        %v1840 = vld [vmem:[%s7 + $0x4] sm:$0xf]
        %v1841 = vld [vmem:[%s7 + $0x8] sm:$0xf]
        %v1842 = vld [vmem:[%s7 + $0xc] sm:$0xf]
        %v1843 = vld [vmem:[%s7 + $0x10] sm:$0xf]
        %v1844 = vld [vmem:[%s7 + $0x14] sm:$0xf]
        %v1845 = vld [vmem:[%s7 + $0x18] sm:$0xf]
        %v1846 = vld [vmem:[%s7 + $0x1c] sm:$0xf]
        %v1847 = vld [vmem:[%s7 + $0x20] sm:$0xf]
        %v1848 = vld [vmem:[%s7 + $0x24] sm:$0xf]
        %v1849 = vld [vmem:[%s7 + $0x28] sm:$0xf]
        %v1850 = vld [vmem:[%s7 + $0x2c] sm:$0xf]
        %v1851 = vld [vmem:[%s7 + $0x30] sm:$0xf]
        %v1852 = vld [vmem:[%s7 + $0x34] sm:$0xf]
        %v1853 = vld [vmem:[%s7 + $0x38] sm:$0xf]
        %v1854 = vld [vmem:[%s7 + $0x3c] sm:$0xf]
        %v1855 = vld [vmem:[%s8] sm:$0x1]
        %v1857 = vlaneseq
        %v1858 = vshrl.u32 %v1857, 7
        %v1859 = vsub.s32 0, %v1858
        %v1860 = vrot.slane %v1855, %v1859
        %v1878 = vunpack.c.l.b16 %v1839
        %v1879 = vunpack.c.l.b16 %v1840
        %v1880 = vunpack.c.l.b16 %v1841
        %v1881 = vunpack.c.l.b16 %v1842
        %v1882 = vunpack.c.l.b16 %v1843
        %v1883 = vunpack.c.l.b16 %v1844
        %v1884 = vunpack.c.l.b16 %v1845
        %v1885 = vunpack.c.l.b16 %v1846
        %v1886 = vunpack.c.l.b16 %v1847
        %v1887 = vunpack.c.l.b16 %v1848
        %v1888 = vunpack.c.l.b16 %v1849
        %v1889 = vunpack.c.l.b16 %v1850
        %v1890 = vunpack.c.l.b16 %v1851
        %v1891 = vunpack.c.l.b16 %v1852
        %v1892 = vunpack.c.l.b16 %v1853
        %v1893 = vunpack.c.l.b16 %v1854
        %v1894 = vpack.c.b16 %v1879, %v1878
        %v1895 = vpack.c.b16 %v1881, %v1880
        %v1896 = vpack.c.b16 %v1883, %v1882
        %v1897 = vpack.c.b16 %v1885, %v1884
        %v1898 = vpack.c.b16 %v1887, %v1886
        %v1899 = vpack.c.b16 %v1889, %v1888
        %v1900 = vpack.c.b16 %v1891, %v1890
        %v1901 = vpack.c.b16 %v1893, %v1892
        %1910 = vmatprep.subr.bf16.mxu0 0
        %1911 = vmatpush1.bf16.msra.mxu0 %v1894
        %1912 = vmatprep.subr.bf16.mxu0 0
        %1913 = vmatpush1.bf16.msra.mxu0 %v1895
        %1914 = vmatprep.subr.bf16.mxu0 0
        %1915 = vmatpush1.bf16.msra.mxu0 %v1896
        %1916 = vmatprep.subr.bf16.mxu0 0
        %1917 = vmatpush1.bf16.msra.mxu0 %v1897
        %1918 = vmatprep.subr.bf16.mxu0 0
        %1919 = vmatpush1.bf16.msra.mxu0 %v1898
        %1920 = vmatprep.subr.bf16.mxu0 0
        %1921 = vmatpush1.bf16.msra.mxu0 %v1899
        %1922 = vmatprep.subr.bf16.mxu0 0
        %1923 = vmatpush1.bf16.msra.mxu0 %v1900
        %1924 = vmatprep.subr.bf16.mxu0 0
        %1925 = vmatpush1.bf16.msra.mxu0 %v1901
        %1926 = vmatprep.subr.bf16.mxu0 0
        %1927 = vmatpush1.bf16.msra.mxu0 0
        %1928 = vmatprep.subr.bf16.mxu0 0
        %1929 = vmatpush1.bf16.msra.mxu0 0
        %1930 = vmatprep.subr.bf16.mxu0 0
        %1931 = vmatpush1.bf16.msra.mxu0 0
        %1932 = vmatprep.subr.bf16.mxu0 0
        %1933 = vmatpush1.bf16.msra.mxu0 0
        %1934 = vmatprep.subr.bf16.mxu0 0
        %1935 = vmatpush1.bf16.msra.mxu0 0
        %1936 = vmatprep.subr.bf16.mxu0 0
        %1937 = vmatpush1.bf16.msra.mxu0 0
        %1938 = vmatprep.subr.bf16.mxu0 0
        %1939 = vmatpush1.bf16.msra.mxu0 0
        %1940 = vmatprep.subr.bf16.mxu0 0
        %1941 = vmatpush1.bf16.msra.mxu0 0
        %1942 = vmatprep.mubr.bf16.mxu0 0
        %1943 = vmatmul.mubr.bf16.gmra.mrb[0].mxu0 %v1832
        %v1944 = vpop.f32.mrb[0].mxu0
        %v1945 = vadd.f32 %v1860, %v1944
        %v1946 = vpop.f32.mrb[0].mxu0
        %v1947 = vpop.f32.mrb[0].mxu0
        %v1948 = vadd.f32 %v1860, %v1947
        %v1949 = vpop.f32.mrb[0].mxu0
        %1950 = vmatprep.mubr.bf16.mxu0 0
        %1951 = vmatmul.mubr.bf16.gmra.mrb[0].mxu0 %v1833
        %v1952 = vpop.f32.mrb[0].mxu0
        %v1953 = vadd.f32 %v1860, %v1952
        %v1954 = vpop.f32.mrb[0].mxu0
        %v1955 = vpop.f32.mrb[0].mxu0
        %v1956 = vadd.f32 %v1860, %v1955
        %v1957 = vpop.f32.mrb[0].mxu0
        %1958 = vmatprep.mubr.bf16.mxu0 0
        %1959 = vmatmul.mubr.bf16.gmra.mrb[0].mxu0 %v1834
        %v1960 = vpop.f32.mrb[0].mxu0
        %v1961 = vadd.f32 %v1860, %v1960
        %v1962 = vpop.f32.mrb[0].mxu0
        %v1963 = vpop.f32.mrb[0].mxu0
        %v1964 = vadd.f32 %v1860, %v1963
        %v1965 = vpop.f32.mrb[0].mxu0
        %1966 = vmatprep.mubr.bf16.mxu0 0
        %1967 = vmatmul.mubr.bf16.gmra.mrb[0].mxu0 %v1835
        %v1968 = vpop.f32.mrb[0].mxu0
        %v1969 = vadd.f32 %v1860, %v1968
        %v1970 = vpop.f32.mrb[0].mxu0
        %v1971 = vpop.f32.mrb[0].mxu0
        %v1972 = vadd.f32 %v1860, %v1971
        %v1973 = vpop.f32.mrb[0].mxu0
        %1974 = vmatprep.mubr.bf16.mxu0 0
        %1975 = vmatmul.mubr.bf16.gmra.mrb[0].mxu0 %v1836
        %v1976 = vpop.f32.mrb[0].mxu0
        %v1977 = vadd.f32 %v1860, %v1976
        %v1978 = vpop.f32.mrb[0].mxu0
        %v1979 = vpop.f32.mrb[0].mxu0
        %v1980 = vadd.f32 %v1860, %v1979
        %v1981 = vpop.f32.mrb[0].mxu0
        %1982 = vmatprep.mubr.bf16.mxu0 0
        %1983 = vmatmul.mubr.bf16.gmra.mrb[0].mxu0 %v1837
        %v1984 = vpop.f32.mrb[0].mxu0
        %v1985 = vadd.f32 %v1860, %v1984
        %v1986 = vpop.f32.mrb[0].mxu0
        %v1987 = vpop.f32.mrb[0].mxu0
        %v1988 = vadd.f32 %v1860, %v1987
        %v1989 = vpop.f32.mrb[0].mxu0
        %1990 = vmatprep.mubr.bf16.mxu0 0
        %1991 = vmatmul.mubr.bf16.gmra.mrb[0].mxu0 %v1838
        %v1992 = vpop.f32.mrb[0].mxu0
        %v1993 = vadd.f32 %v1860, %v1992
        %v1994 = vpop.f32.mrb[0].mxu0
        %v1995 = vpop.f32.mrb[0].mxu0
        %v1996 = vpop.f32.mrb[0].mxu0
        %1997 = vdwg.mxu0
        %v1998 = vpack.c.bf16 %v1948, %v1945
        %v1999 = vpack.c.bf16 %v1956, %v1953
        %v2000 = vpack.c.bf16 %v1964, %v1961
        %v2001 = vpack.c.bf16 %v1972, %v1969
        %v2002 = vpack.c.bf16 %v1980, %v1977
        %v2003 = vpack.c.bf16 %v1988, %v1985
        %v2004 = vpack.c.bf16 %v1993, %v1993
        %v2005 = vld [vmem:[%s9] sm:$0xf]
        %v2006 = vld [vmem:[%s9 + $0x4] sm:$0xf]
        %v2007 = vld [vmem:[%s9 + $0x8] sm:$0xf]
        %v2008 = vld [vmem:[%s9 + $0xc] sm:$0xf]
        %v2009 = vld [vmem:[%s9 + $0x10] sm:$0xf]
        %v2010 = vld [vmem:[%s9 + $0x14] sm:$0xf]
        %v2011 = vld [vmem:[%s9 + $0x18] sm:$0xf]
        %v2012 = vld [vmem:[%s9 + $0x1c] sm:$0xf]
        %v2013 = vld [vmem:[%s9 + $0x20] sm:$0xf]
        %v2014 = vld [vmem:[%s9 + $0x24] sm:$0xf]
        %v2015 = vld [vmem:[%s9 + $0x28] sm:$0xf]
        %v2016 = vld [vmem:[%s9 + $0x2c] sm:$0xf]
        %v2017 = vld [vmem:[%s9 + $0x30] sm:$0xf]
        %v2018 = vld [vmem:[%s9 + $0x34] sm:$0xf]
        %v2019 = vld [vmem:[%s9 + $0x38] sm:$0xf]
        %v2020 = vld [vmem:[%s9 + $0x3c] sm:$0xf]
        %v2037 = vunpack.c.l.b16 %v2005
        %v2038 = vunpack.c.l.b16 %v2006
        %v2039 = vunpack.c.l.b16 %v2007
        %v2040 = vunpack.c.l.b16 %v2008
        %v2041 = vunpack.c.l.b16 %v2009
        %v2042 = vunpack.c.l.b16 %v2010
        %v2043 = vunpack.c.l.b16 %v2011
        %v2044 = vunpack.c.l.b16 %v2012
        %v2045 = vunpack.c.l.b16 %v2013
        %v2046 = vunpack.c.l.b16 %v2014
        %v2047 = vunpack.c.l.b16 %v2015
        %v2048 = vunpack.c.l.b16 %v2016
        %v2049 = vunpack.c.l.b16 %v2017
        %v2050 = vunpack.c.l.b16 %v2018
        %v2051 = vunpack.c.l.b16 %v2019
        %v2052 = vunpack.c.l.b16 %v2020
        %v2053 = vpack.c.b16 %v2038, %v2037
        %v2054 = vpack.c.b16 %v2040, %v2039
        %v2055 = vpack.c.b16 %v2042, %v2041
        %v2056 = vpack.c.b16 %v2044, %v2043
        %v2057 = vpack.c.b16 %v2046, %v2045
        %v2058 = vpack.c.b16 %v2048, %v2047
        %v2059 = vpack.c.b16 %v2050, %v2049
        %v2060 = vpack.c.b16 %v2052, %v2051
        %2069 = vmatprep.subr.bf16.mxu0 0
        %2070 = vmatpush1.bf16.msra.mxu0 %v2053
        %2071 = vmatprep.subr.bf16.mxu0 0
        %2072 = vmatpush1.bf16.msra.mxu0 %v2054
        %2073 = vmatprep.subr.bf16.mxu0 0
        %2074 = vmatpush1.bf16.msra.mxu0 %v2055
        %2075 = vmatprep.subr.bf16.mxu0 0
        %2076 = vmatpush1.bf16.msra.mxu0 %v2056
        %2077 = vmatprep.subr.bf16.mxu0 0
        %2078 = vmatpush1.bf16.msra.mxu0 %v2057
        %2079 = vmatprep.subr.bf16.mxu0 0
        %2080 = vmatpush1.bf16.msra.mxu0 %v2058
        %2081 = vmatprep.subr.bf16.mxu0 0
        %2082 = vmatpush1.bf16.msra.mxu0 %v2059
        %2083 = vmatprep.subr.bf16.mxu0 0
        %2084 = vmatpush1.bf16.msra.mxu0 %v2060
        %2085 = vmatprep.subr.bf16.mxu0 0
        %2086 = vmatpush1.bf16.msra.mxu0 0
        %2087 = vmatprep.subr.bf16.mxu0 0
        %2088 = vmatpush1.bf16.msra.mxu0 0
        %2089 = vmatprep.subr.bf16.mxu0 0
        %2090 = vmatpush1.bf16.msra.mxu0 0
        %2091 = vmatprep.subr.bf16.mxu0 0
        %2092 = vmatpush1.bf16.msra.mxu0 0
        %2093 = vmatprep.subr.bf16.mxu0 0
        %2094 = vmatpush1.bf16.msra.mxu0 0
        %2095 = vmatprep.subr.bf16.mxu0 0
        %2096 = vmatpush1.bf16.msra.mxu0 0
        %2097 = vmatprep.subr.bf16.mxu0 0
        %2098 = vmatpush1.bf16.msra.mxu0 0
        %2099 = vmatprep.subr.bf16.mxu0 0
        %2100 = vmatpush1.bf16.msra.mxu0 0
        %2101 = vmatprep.mubr.bf16.mxu0 0
        %2102 = vmatmul.mubr.bf16.gmra.mrb[0].mxu0 %v1998
        %v2103 = vpop.f32.mrb[0].mxu0
        %v2104 = vadd.f32 0.0, %v2103
        %v2105 = vpop.f32.mrb[0].mxu0
        %v2106 = vpop.f32.mrb[0].mxu0
        %v2107 = vadd.f32 0.0, %v2106
        %v2108 = vpop.f32.mrb[0].mxu0
        %2109 = vmatprep.mubr.bf16.mxu0 0
        %2110 = vmatmul.mubr.bf16.gmra.mrb[0].mxu0 %v1999
        %v2111 = vpop.f32.mrb[0].mxu0
        %v2112 = vadd.f32 0.0, %v2111
        %v2113 = vpop.f32.mrb[0].mxu0
        %v2114 = vpop.f32.mrb[0].mxu0
        %v2115 = vadd.f32 0.0, %v2114
        %v2116 = vpop.f32.mrb[0].mxu0
        %2117 = vmatprep.mubr.bf16.mxu0 0
        %2118 = vmatmul.mubr.bf16.gmra.mrb[0].mxu0 %v2000
        %v2119 = vpop.f32.mrb[0].mxu0
        %v2120 = vadd.f32 0.0, %v2119
        %v2121 = vpop.f32.mrb[0].mxu0
        %v2122 = vpop.f32.mrb[0].mxu0
        %v2123 = vadd.f32 0.0, %v2122
        %v2124 = vpop.f32.mrb[0].mxu0
        %2125 = vmatprep.mubr.bf16.mxu0 0
        %2126 = vmatmul.mubr.bf16.gmra.mrb[0].mxu0 %v2001
        %v2127 = vpop.f32.mrb[0].mxu0
        %v2128 = vadd.f32 0.0, %v2127
        %v2129 = vpop.f32.mrb[0].mxu0
        %v2130 = vpop.f32.mrb[0].mxu0
        %v2131 = vadd.f32 0.0, %v2130
        %v2132 = vpop.f32.mrb[0].mxu0
        %2133 = vmatprep.mubr.bf16.mxu0 0
        %2134 = vmatmul.mubr.bf16.gmra.mrb[0].mxu0 %v2002
        %v2135 = vpop.f32.mrb[0].mxu0
        %v2136 = vadd.f32 0.0, %v2135
        %v2137 = vpop.f32.mrb[0].mxu0
        %v2138 = vpop.f32.mrb[0].mxu0
        %v2139 = vadd.f32 0.0, %v2138
        %v2140 = vpop.f32.mrb[0].mxu0
        %2141 = vmatprep.mubr.bf16.mxu0 0
        %2142 = vmatmul.mubr.bf16.gmra.mrb[0].mxu0 %v2003
        %v2143 = vpop.f32.mrb[0].mxu0
        %v2144 = vadd.f32 0.0, %v2143
        %v2145 = vpop.f32.mrb[0].mxu0
        %v2146 = vpop.f32.mrb[0].mxu0
        %v2147 = vadd.f32 0.0, %v2146
        %v2148 = vpop.f32.mrb[0].mxu0
        %2149 = vmatprep.mubr.bf16.mxu0 0
        %2150 = vmatmul.mubr.bf16.gmra.mrb[0].mxu0 %v2004
        %v2151 = vpop.f32.mrb[0].mxu0
        %v2152 = vadd.f32 0.0, %v2151
        %v2153 = vpop.f32.mrb[0].mxu0
        %v2154 = vpop.f32.mrb[0].mxu0
        %v2155 = vpop.f32.mrb[0].mxu0
        %2156 = vdwg.mxu0
        %v2157 = vlaneseq
        %v2158 = vand.u32 %v2157, 127
        %vm2159 = vcmp.eq.s32.totalorder %v2158, 10
        %2161 = vset.pattern.permute.xlu0 0
        %2162 = vperm.xlu0 %2161, %v1439
        %v2163 = vpop.permute.xlu0 %2162
        %2166 = vset.pattern.permute.xlu0 0
        %2167 = vperm.xlu0 %2166, %v1440
        %v2168 = vpop.permute.xlu0 %2167
        %2171 = vset.pattern.permute.xlu0 0
        %2172 = vperm.xlu0 %2171, %v1441
        %v2173 = vpop.permute.xlu0 %2172
        %2176 = vset.pattern.permute.xlu0 0
        %2177 = vperm.xlu0 %2176, %v1442
        %v2178 = vpop.permute.xlu0 %2177
        %2181 = vset.pattern.permute.xlu0 0
        %2182 = vperm.xlu0 %2181, %v1443
        %v2183 = vpop.permute.xlu0 %2182
        %2186 = vset.pattern.permute.xlu0 0
        %2187 = vperm.xlu0 %2186, %v1444
        %v2188 = vpop.permute.xlu0 %2187
        %2191 = vset.pattern.permute.xlu0 0
        %2192 = vperm.xlu0 %2191, %v1445
        %v2193 = vpop.permute.xlu0 %2192
        %2196 = vset.pattern.permute.xlu0 0
        %2197 = vperm.xlu0 %2196, %v1446
        %v2198 = vpop.permute.xlu0 %2197
        %2201 = vset.pattern.permute.xlu0 0
        %2202 = vperm.xlu0 %2201, %v1447
        %v2203 = vpop.permute.xlu0 %2202
        %2206 = vset.pattern.permute.xlu0 0
        %2207 = vperm.xlu0 %2206, %v1448
        %v2208 = vpop.permute.xlu0 %2207
        %2211 = vset.pattern.permute.xlu0 0
        %2212 = vperm.xlu0 %2211, %v1449
        %v2213 = vpop.permute.xlu0 %2212
        %2216 = vset.pattern.permute.xlu0 0
        %2217 = vperm.xlu0 %2216, %v1450
        %v2218 = vpop.permute.xlu0 %2217
        %2221 = vset.pattern.permute.xlu0 0
        %2222 = vperm.xlu0 %2221, %v1451
        %v2223 = vpop.permute.xlu0 %2222
        %v2225 = vsel %vm2159, %v2163, %v2104
        %v2226 = vsel %vm2159, %v2168, %v2107
        %v2227 = vsel %vm2159, %v2173, %v2112
        %v2228 = vsel %vm2159, %v2178, %v2115
        %v2229 = vsel %vm2159, %v2183, %v2120
        %v2230 = vsel %vm2159, %v2188, %v2123
        %v2231 = vsel %vm2159, %v2193, %v2128
        %v2232 = vsel %vm2159, %v2198, %v2131
        %v2233 = vsel %vm2159, %v2203, %v2136
        %v2234 = vsel %vm2159, %v2208, %v2139
        %v2235 = vsel %vm2159, %v2213, %v2144
        %v2236 = vsel %vm2159, %v2218, %v2147
        %v2237 = vsel %vm2159, %v2223, %v2152
        %2238 = vst [vmem:[%s499] sm:$0xff] %v2225
        %2239 = vst [vmem:[%s499 + $0x8] sm:$0xff] %v2226
        %2240 = vst [vmem:[%s499 + $0x10] sm:$0xff] %v2227
        %2241 = vst [vmem:[%s499 + $0x18] sm:$0xff] %v2228
        %2242 = vst [vmem:[%s499 + $0x20] sm:$0xff] %v2229
        %2243 = vst [vmem:[%s499 + $0x28] sm:$0xff] %v2230
        %2244 = vst [vmem:[%s499 + $0x30] sm:$0xff] %v2231
        %2245 = vst [vmem:[%s499 + $0x38] sm:$0xff] %v2232
        %2246 = vst [vmem:[%s499 + $0x40] sm:$0xff] %v2233
        %2247 = vst [vmem:[%s499 + $0x48] sm:$0xff] %v2234
        %2248 = vst [vmem:[%s499 + $0x50] sm:$0xff] %v2235
        %2249 = vst [vmem:[%s499 + $0x58] sm:$0xff] %v2236
        %2250 = vst [vmem:[%s499 + $0x60] sm:$0xf] %v2237
        %v2251 = vmul.f32 %v1945, %v1945
        %v2252 = vmul.f32 %v1948, %v1948
        %v2253 = vmul.f32 %v1953, %v1953
        %v2254 = vmul.f32 %v1956, %v1956
        %v2255 = vmul.f32 %v1961, %v1961
        %v2256 = vmul.f32 %v1964, %v1964
        %v2257 = vmul.f32 %v1969, %v1969
        %v2258 = vmul.f32 %v1972, %v1972
        %v2259 = vmul.f32 %v1977, %v1977
        %v2260 = vmul.f32 %v1980, %v1980
        %v2261 = vmul.f32 %v1985, %v1985
        %v2262 = vmul.f32 %v1988, %v1988
        %v2263 = vmul.f32 %v1993, %v1993
        %2264 = vadd.xlane.f32.xlu0 %v2251
        %v2265 = vpop.xlane.xlu0 %2264
        %2266 = vadd.xlane.f32.xlu0 %v2252
        %v2267 = vpop.xlane.xlu0 %2266
        %2268 = vadd.xlane.f32.xlu0 %v2253
        %v2269 = vpop.xlane.xlu0 %2268
        %2270 = vadd.xlane.f32.xlu0 %v2254
        %v2271 = vpop.xlane.xlu0 %2270
        %2272 = vadd.xlane.f32.xlu0 %v2255
        %v2273 = vpop.xlane.xlu0 %2272
        %2274 = vadd.xlane.f32.xlu0 %v2256
        %v2275 = vpop.xlane.xlu0 %2274
        %2276 = vadd.xlane.f32.xlu0 %v2257
        %v2277 = vpop.xlane.xlu0 %2276
        %2278 = vadd.xlane.f32.xlu0 %v2258
        %v2279 = vpop.xlane.xlu0 %2278
        %2280 = vadd.xlane.f32.xlu0 %v2259
        %v2281 = vpop.xlane.xlu0 %2280
        %2282 = vadd.xlane.f32.xlu0 %v2260
        %v2283 = vpop.xlane.xlu0 %2282
        %2284 = vadd.xlane.f32.xlu0 %v2261
        %v2285 = vpop.xlane.xlu0 %2284
        %2286 = vadd.xlane.f32.xlu0 %v2262
        %v2287 = vpop.xlane.xlu0 %2286
        %v2288 = vsel %vm1376, %v2263, 0.0
        %2289 = vadd.xlane.f32.xlu0 %v2288
        %v2290 = vpop.xlane.xlu0 %2289
        %v2291 = vmax.f32 %v2265, 1e-24
        %v2292 = vmax.f32 %v2267, 1e-24
        %v2293 = vmax.f32 %v2269, 1e-24
        %v2294 = vmax.f32 %v2271, 1e-24
        %v2295 = vmax.f32 %v2273, 1e-24
        %v2296 = vmax.f32 %v2275, 1e-24
        %v2297 = vmax.f32 %v2277, 1e-24
        %v2298 = vmax.f32 %v2279, 1e-24
        %v2299 = vmax.f32 %v2281, 1e-24
        %v2300 = vmax.f32 %v2283, 1e-24
        %v2301 = vmax.f32 %v2285, 1e-24
        %v2302 = vmax.f32 %v2287, 1e-24
        %v2303 = vmax.f32 %v2290, 1e-24
        %v2304 = vrsqrt.pop %v2291
        %v2305 = vrsqrt.pop %v2292
        %v2306 = vrsqrt.pop %v2293
        %v2307 = vrsqrt.pop %v2294
        %v2308 = vrsqrt.pop %v2295
        %v2309 = vrsqrt.pop %v2296
        %v2310 = vrsqrt.pop %v2297
        %v2311 = vrsqrt.pop %v2298
        %v2312 = vrsqrt.pop %v2299
        %v2313 = vrsqrt.pop %v2300
        %v2314 = vrsqrt.pop %v2301
        %v2315 = vrsqrt.pop %v2302
        %v2316 = vrsqrt.pop %v2303
        %v2317 = vmul.f32 %v1945, %v2304
        %v2318 = vmul.f32 %v1948, %v2305
        %v2319 = vmul.f32 %v1953, %v2306
        %v2320 = vmul.f32 %v1956, %v2307
        %v2321 = vmul.f32 %v1961, %v2308
        %v2322 = vmul.f32 %v1964, %v2309
        %v2323 = vmul.f32 %v1969, %v2310
        %v2324 = vmul.f32 %v1972, %v2311
        %v2325 = vmul.f32 %v1977, %v2312
        %v2326 = vmul.f32 %v1980, %v2313
        %v2327 = vmul.f32 %v1985, %v2314
        %v2328 = vmul.f32 %v1988, %v2315
        %v2329 = vmul.f32 %v1993, %v2316
        %2330 = vst [vmem:[%s494] sm:$0xff] %v2317
        %2331 = vst [vmem:[%s494 + $0x8] sm:$0xff] %v2318
        %2332 = vst [vmem:[%s494 + $0x10] sm:$0xff] %v2319
        %2333 = vst [vmem:[%s494 + $0x18] sm:$0xff] %v2320
        %2334 = vst [vmem:[%s494 + $0x20] sm:$0xff] %v2321
        %2335 = vst [vmem:[%s494 + $0x28] sm:$0xff] %v2322
        %2336 = vst [vmem:[%s494 + $0x30] sm:$0xff] %v2323
        %2337 = vst [vmem:[%s494 + $0x38] sm:$0xff] %v2324
        %2338 = vst [vmem:[%s494 + $0x40] sm:$0xff] %v2325
        %2339 = vst [vmem:[%s494 + $0x48] sm:$0xff] %v2326
        %2340 = vst [vmem:[%s494 + $0x50] sm:$0xff] %v2327
        %2341 = vst [vmem:[%s494 + $0x58] sm:$0xff] %v2328
        %2342 = vst [vmem:[%s494 + $0x60] sm:$0xf] %v2329
      $region68: #{metric_model_forward.3} parent=59 // pred_fallthru
        _
      %p2343 = scmp.lt.s32.totalorder %s27, 1
      %s2344 = scalar_select %p2343, %s27, 1
      %s2345 = smul.addr %s2344, 13
      %s2346 = smul.addr %s2345, 8
      %s2347 = scalar_lea.vmem %s10, %s2346
      %p2348 = scmp.lt.s32.totalorder %s27, 1
      %s2349 = scalar_select %p2348, %s27, 1
      %s2350 = smul.addr %s2349, 13
      %s2351 = smul.addr %s2350, 8
      %s2352 = scalar_lea.vmem %s11, %s2351
      // Predicated region
      $region69: #{metric_model_forward.3} parent=59 // pred_check
        %p2353 = pneg %p284
      $region70: #{metric_model_forward.3} parent=59 // pred_check_branch
        %2355 = sbr.rel (%p2353) target = $region72
      $region71: #{metric_model_forward.3} parent=59 // pred_region
        _
      $region72: #{metric_model_forward.3} parent=59 // pred_fallthru
        _
      // Predicated region
      $region73: #{metric_model_forward.3} parent=59 // pred_check
        %p2356 = pneg %p310
      $region74: #{metric_model_forward.3} parent=59 // pred_check_branch
        %2358 = sbr.rel (%p2356) target = $region76
      $region75: #{metric_model_forward.3} parent=59 // pred_region
        _
      $region76: #{metric_model_forward.3} parent=59 // pred_fallthru
        _
    $region60: #{metric_model_forward.3} parent=5 // pred_fallthru
      _
    %p2359 = scmp.le.s32.totalorder 2, %s18
    // Predicated region
    $region77: #{metric_model_forward.3} parent=5 // pred_check
      %p2360 = pneg %p2359
    $region78: #{metric_model_forward.3} parent=5 // pred_check_branch
      %2362 = sbr.rel (%p2360) target = $region80
    $region79: #{metric_model_forward.3} parent=5 // pred_region
      %s2363 = ssub.s32 %s18, 2
      // Predicated region
      $region81: #{metric_model_forward.3} parent=79 // pred_check
        %p2364 = pneg %p290
      $region82: #{metric_model_forward.3} parent=79 // pred_check_branch
        %2366 = sbr.rel (%p2364) target = $region84
      $region83: #{metric_model_forward.3} parent=79 // pred_region
        %p2367 = scmp.lt.s32.totalorder %s29, 1
        %s2368 = scalar_select %p2367, %s29, 1
        %s2369 = smul.addr %s2368, 13
        %s2370 = smul.addr %s2369, 8
        %s2371 = scalar_lea.vmem %s10, %s2370
      $region84: #{metric_model_forward.3} parent=79 // pred_fallthru
        _
      // Predicated region
      $region85: #{metric_model_forward.3} parent=79 // pred_check
        %p2372 = pneg %p316
      $region86: #{metric_model_forward.3} parent=79 // pred_check_branch
        %2374 = sbr.rel (%p2372) target = $region88
      $region87: #{metric_model_forward.3} parent=79 // pred_region
        %p2375 = scmp.lt.s32.totalorder %s29, 1
        %s2376 = scalar_select %p2375, %s29, 1
        %s2377 = smul.addr %s2376, 13
        %s2378 = smul.addr %s2377, 8
        %s2379 = scalar_lea.vmem %s11, %s2378
      $region88: #{metric_model_forward.3} parent=79 // pred_fallthru
        _
    $region80: #{metric_model_forward.3} parent=5 // pred_fallthru
      _
  $region6: #{metric_model_forward.3} parent=0 // loop_footer
    %s22 = sadd.s32 1, %s18
  $region7: #{metric_model_forward.3} parent=0 // loop_footer_branch
    %17 = sbr.rel target = $region3
  $region8: #{metric_model_forward.3} parent=0 // loop_exit
    _

</llo_original>
